<compile_context>
chip_gen: v6e
topology: v6e:2x2x1
jax: 0.10.0
libtpu: 0.0.40
codegen_flags: <defaults>
</compile_context>

<pallas_src>
import functools

import jax
import jax.numpy as jnp
from jax.experimental import pallas as pl
from jax.experimental.pallas import tpu as pltpu

INF = -100000.0   # finite "-inf" sentinel, same as the PyTorch reference
NEG = -1.0e30     # additive mask: logaddexp(x, y - 1e30) == x exactly in f32


def _round_up(v, m):
    return ((v + m - 1) // m) * m


# --------------------------------------------------------------------------
# Kernel 1: encoder-projection + CTC head + log_softmax + fused label gather
#   grid = (B, Tp // TT); weights / biases stay VMEM-resident per batch.
# --------------------------------------------------------------------------
def encoder_head_kernel(x_ref, w1_ref, b1_ref, w2_ref, b2_ref, lf_ref,
                        logits_ref, lprob_ref):
    x = x_ref[0]                                                       # (TT, F)
    h = jnp.dot(x, w1_ref[...], preferred_element_type=jnp.float32) + b1_ref[...]
    h = jnp.maximum(h, 0.0)                                            # (TT, Dp)
    logits = jnp.dot(h, w2_ref[...], preferred_element_type=jnp.float32) + b2_ref[...]
    logits_ref[0] = logits                                             # (TT, Cp)

    # log_softmax; padded class columns carry bias NEG so they never win the
    # max and contribute exp(~-1e30) == 0 to the denominator.
    m = jnp.max(logits, axis=-1, keepdims=True)
    lse = jnp.log(jnp.sum(jnp.exp(logits - m), axis=-1, keepdims=True)) + m
    logp = logits - lse

    # In-kernel one-hot (Cp, Sp) from the padded label row (padded s slots are
    # -1 so they match no class -> all-zero columns).  Fused gather:
    #   labels_prob[t, s] = logp[t, labels_full[b, s]]  via one MXU matmul.
    cp = logits.shape[-1]
    sp = lprob_ref.shape[-1]
    cls = jax.lax.broadcasted_iota(jnp.int32, (cp, sp), 0)
    oh = jnp.where(lf_ref[0] == cls, 1.0, 0.0).astype(jnp.float32)     # (Cp, Sp)
    lprob_ref[0] = jnp.dot(logp, oh, preferred_element_type=jnp.float32)


def encoder_head_ctcprep(xp, w1, b1, w2, b2, lf3, TT):
    B, Tp, F = xp.shape
    Dp = w1.shape[1]
    Cp = w2.shape[1]
    Sp = lf3.shape[2]
    nT = pl.cdiv(Tp, TT)
    return pl.pallas_call(
        encoder_head_kernel,
        out_shape=(jax.ShapeDtypeStruct((B, Tp, Cp), jnp.float32),
                   jax.ShapeDtypeStruct((B, Tp, Sp), jnp.float32)),
        grid_spec=pltpu.PrefetchScalarGridSpec(
            num_scalar_prefetch=0,
            grid=(B, nT),
            in_specs=[
                pl.BlockSpec((1, TT, F), lambda b, i: (b, i, 0)),
                pl.BlockSpec((F, Dp), lambda b, i: (0, 0)),
                pl.BlockSpec((1, Dp), lambda b, i: (0, 0)),
                pl.BlockSpec((Dp, Cp), lambda b, i: (0, 0)),
                pl.BlockSpec((1, Cp), lambda b, i: (0, 0)),
                pl.BlockSpec((1, 1, Sp), lambda b, i: (b, 0, 0)),
            ],
            out_specs=(
                pl.BlockSpec((1, TT, Cp), lambda b, i: (b, i, 0)),
                pl.BlockSpec((1, TT, Sp), lambda b, i: (b, i, 0)),
            ),
        ),
        compiler_params=pltpu.CompilerParams(
            dimension_semantics=("parallel", "parallel"),
            vmem_limit_bytes=48 * 1024 * 1024),
    )(xp, w1, b1, w2, b2, lf3)


# --------------------------------------------------------------------------
# Kernel 2: time-blocked CTC forward (alpha) recursion.
#   grid = (Tr // TB,) sequential; alpha carry in VMEM scratch.  min/max of
#   lengths are scalar-prefetched to SMEM: blocks past max(lengths) are skipped
#   entirely, and the per-step output capture only exists in blocks that can
#   contain some (length-1).  Only the (B, Sp) alpha row at t == length-1 is
#   written out (accumulator output block, constant index_map).
# --------------------------------------------------------------------------
def ctc_alpha_kernel(mm_ref, lp_ref, mask2_ref, edge1_ref, len_ref,
                     alpha_ref, alpha_sc):
    tb = pl.program_id(0)
    tb_len = lp_ref.shape[1]
    lo = tb * tb_len
    min_len = mm_ref[0]
    max_len = mm_ref[1]

    @pl.when(tb == 0)
    def _():
        alpha_sc[...] = jnp.full(alpha_sc.shape, INF, jnp.float32)
        alpha_ref[...] = jnp.full(alpha_ref.shape, INF, jnp.float32)

    block_active = lo < max_len                                    # any seq still running
    capture_here = (min_len - 1 < lo + tb_len) & (max_len - 1 >= lo)

    mask2 = mask2_ref[...]                    # (B, Sp) additive: 0 / -1e30
    edge1 = edge1_ref[...]                    # (1, Sp) additive: -1e30 at s==0
    lens = len_ref[...]                       # (B, 1) int32
    col = jax.lax.broadcasted_iota(jnp.int32, alpha_sc.shape, 1)

    def make_step(capture):
        def step(tl, carry):
            t = lo + tl                                            # global timestep
            lp_t = lp_ref[:, pl.ds(tl, 1), :][:, 0, :]             # (B, Sp)
            prev = alpha_sc[...]
            sh1 = pltpu.roll(prev, shift=1, axis=1) + edge1        # prev[s-1]
            sh2 = pltpu.roll(prev, shift=2, axis=1) + mask2        # prev[s-2] (masked)
            # 3-way log-sum-exp (single log; shorter dependency chain).
            m = jnp.maximum(prev, jnp.maximum(sh1, sh2))
            upd = m + jnp.log(jnp.exp(prev - m) + jnp.exp(sh1 - m)
                              + jnp.exp(sh2 - m)) + lp_t
            init = jnp.where(col < 2, lp_t, INF)
            alpha = jnp.where(t == 0, init, upd)
            alpha_sc[...] = alpha
            if capture:
                # capture alpha at the last valid frame of each sequence
                alpha_ref[...] = jnp.where(t == (lens - 1), alpha, alpha_ref[...])
            return carry
        return step

    @pl.when(block_active & capture_here)
    def _():
        jax.lax.fori_loop(0, tb_len, make_step(True), 0, unroll=8)

    @pl.when(block_active & jnp.logical_not(capture_here))
    def _():
        jax.lax.fori_loop(0, tb_len, make_step(False), 0, unroll=8)


def ctc_alpha_last(labels_prob, mask2_add, edge1_add, lens2d, minmax, TB, Tr):
    B, Tp, Sp = labels_prob.shape
    return pl.pallas_call(
        ctc_alpha_kernel,
        out_shape=jax.ShapeDtypeStruct((B, Sp), jnp.float32),
        grid_spec=pltpu.PrefetchScalarGridSpec(
            num_scalar_prefetch=1,
            grid=(Tr // TB,),
            in_specs=[
                pl.BlockSpec((B, TB, Sp), lambda t, mm: (0, t, 0)),
                pl.BlockSpec((B, Sp), lambda t, mm: (0, 0)),
                pl.BlockSpec((1, Sp), lambda t, mm: (0, 0)),
                pl.BlockSpec((B, 1), lambda t, mm: (0, 0)),
            ],
            out_specs=pl.BlockSpec((B, Sp), lambda t, mm: (0, 0)),
            scratch_shapes=[pltpu.VMEM((B, Sp), jnp.float32)]),
        compiler_params=pltpu.CompilerParams(
            dimension_semantics=("arbitrary",),
            vmem_limit_bytes=48 * 1024 * 1024),
    )(minmax, labels_prob, mask2_add, edge1_add, lens2d)


# --------------------------------------------------------------------------
# Full forward: mirrors SpeechEncoderCTC.forward (loss_impl='mine', blank=0)
# --------------------------------------------------------------------------
@functools.partial(jax.jit, static_argnames=("blank",))
def speech_encoder_ctc_forward(x, lengths, labels,
                               w_enc, b_enc, w_head, b_head, blank=0):
    B, T, F = x.shape
    D = w_enc.shape[1]
    C = w_head.shape[1]
    Lmax = labels.shape[1]
    S = 2 * Lmax + 1

    # lane-dense padded dims + time blocking.  TB (kernel-2 block) divides TT
    # (kernel-1 tile) so kernel-2's time extent can be decoupled from Tp.
    Dp = _round_up(D, 128)
    Cp = _round_up(C, 128)
    Sp = _round_up(S, 128)
    TB = 64 if T >= 64 else _round_up(T, 8)        # kernel-2 time block
    TT = 256 if T >= 256 else _round_up(T, TB)     # kernel-1 time tile (per batch)
    Tp = _round_up(T, TT)                          # kernel-1 padded time extent
    Tr = _round_up(T, TB)                          # kernel-2 time extent (<= Tp)

    # zero-pad weights; padded head-bias columns get NEG so padded classes
    # never affect the softmax max / logsumexp.
    w1 = jnp.zeros((F, Dp), jnp.float32).at[:, :D].set(w_enc)
    b1 = jnp.zeros((1, Dp), jnp.float32).at[:, :D].set(b_enc.reshape(1, D))
    w2 = jnp.zeros((Dp, Cp), jnp.float32).at[:D, :C].set(w_head)
    b2 = jnp.full((1, Cp), NEG, jnp.float32).at[:, :C].set(b_head.reshape(1, C))

    xp = x if Tp == T else jnp.pad(x, ((0, 0), (0, Tp - T), (0, 0)))

    # ---- CTC label prep (tiny host-side glue; no one-hot materialization) ----
    labels_i = labels.astype(jnp.int32)
    labels_full = jnp.full((B, S), blank, jnp.int32).at[:, 1::2].set(labels_i)
    lf_pad = jnp.full((B, Sp), -1, jnp.int32).at[:, :S].set(labels_full)
    lf3 = lf_pad.reshape(B, 1, Sp)                 # padded s slots match no class

    s_idx = jnp.arange(Sp)
    allowed = jnp.zeros((B, Sp), bool).at[:, 2:S].set(
        labels_full[:, 2:] != labels_full[:, :-2])
    allowed = allowed & (s_idx[None, :] % 2 == 1)
    # NOTE: padded Sp columns never feed valid ones: roll wraparound is only
    # neutralized at s=0,1 via edge1/mask2, and padded lp columns are 0.
    mask2_add = jnp.where(allowed, 0.0, NEG).astype(jnp.float32)        # (B, Sp)
    edge1_add = jnp.where(s_idx == 0, NEG, 0.0)[None, :].astype(jnp.float32)

    # kernel 1: encoder (stand-in) + head + log_softmax + fused label gather
    logits_pad, labels_prob = encoder_head_ctcprep(xp, w1, b1, w2, b2, lf3, TT)
    logits = logits_pad[:, :T, :C]

    # kernel 2: alpha recursion; returns alpha at t == input_length-1 per batch
    # (assumes lengths <= T, as does the PyTorch reference).
    lens_i = lengths.astype(jnp.int32)
    lens2d = lens_i.reshape(B, 1)
    minmax = jnp.stack([jnp.min(lens_i), jnp.max(lens_i)]).astype(jnp.int32)
    alpha_last = ctc_alpha_last(labels_prob, mask2_add, edge1_add, lens2d,
                                minmax, TB, Tr)

    # final per-batch extraction (scalar glue, matches the 'mine' reference)
    target_lengths = jnp.sum(labels_i != blank, axis=1)                 # (B,)
    b_idx = jnp.arange(B)
    s1 = 2 * target_lengths                                             # < S always
    s2 = (s1 - 1) % S                                                   # torch negative indexing
    a1 = alpha_last[b_idx, s1]
    a2 = alpha_last[b_idx, s2]
    seq_prob = jnp.logaddexp(a1, a2)
    seq_prob = jnp.where(jnp.isinf(seq_prob), 0.0, seq_prob)            # zero_infinity (dead in 'mine' too)
    # NOTE: like the PyTorch reference, a zero target_length divides by zero here.
    loss = jnp.mean(-seq_prob / target_lengths.astype(jnp.float32))
    return logits, loss


if __name__ == "__main__":
    B, T, F, D, C = 2, 8, 16, 32, 16     # batch, time, feat, transformer dim, classes
    Lmax = 4                             # max target length -> S = 9

    key = jax.random.PRNGKey(0)
    kx, k1, k2, k3, k4 = jax.random.split(key, 5)

    x = jax.random.normal(kx, (B, T, F), dtype=jnp.float32)
    lengths = jnp.array([8, 6], dtype=jnp.int32)
    labels = jnp.array([[3, 5, 2, 0],
                        [7, 1, 0, 0]], dtype=jnp.int32)  # 0 = blank / pad

    w_enc = 0.1 * jax.random.normal(k1, (F, D), dtype=jnp.float32)
    b_enc = 0.1 * jax.random.normal(k2, (1, D), dtype=jnp.float32)
    w_head = 0.1 * jax.random.normal(k3, (D, C), dtype=jnp.float32)
    b_head = 0.1 * jax.random.normal(k4, (1, C), dtype=jnp.float32)

    logits, loss = speech_encoder_ctc_forward(
        x, lengths, labels, w_enc, b_enc, w_head, b_head, blank=0)
    jax.block_until_ready((logits, loss))

    assert logits.shape == (B, T, C)
    assert jnp.isfinite(loss)
    print("KERNEL_OK")
</pallas_src>

<mosaic_0001>
module attributes {stable_mosaic.version = 11 : i64} {
  func.func @encoder_head_kernel(%arg0: i32, %arg1: i32, %arg2: memref<1x8x16xf32, #tpu.memory_space<vmem>>, %arg3: memref<16x128xf32, #tpu.memory_space<vmem>>, %arg4: memref<1x128xf32, #tpu.memory_space<vmem>>, %arg5: memref<128x128xf32, #tpu.memory_space<vmem>>, %arg6: memref<1x128xf32, #tpu.memory_space<vmem>>, %arg7: memref<1x1x128xi32, #tpu.memory_space<vmem>>, %arg8: memref<1x8x128xf32, #tpu.memory_space<vmem>>, %arg9: memref<1x8x128xf32, #tpu.memory_space<vmem>>) attributes {dimension_semantics = [#tpu.dimension_semantics<parallel>, #tpu.dimension_semantics<parallel>], iteration_bounds = array<i64: 2, 1>, scalar_prefetch = 0 : i64, scratch_operands = 0 : i64, tpu.core_type = #tpu.core_type<tc>, window_params = [{transform_indices = @transform_0, window_bounds = array<i64: 1, 8, 16>}, {pipeline_mode = #tpu.pipeline_mode<synchronous>, transform_indices = @transform_1, window_bounds = array<i64: 16, 128>}, {pipeline_mode = #tpu.pipeline_mode<synchronous>, transform_indices = @transform_2, window_bounds = array<i64: 1, 128>}, {pipeline_mode = #tpu.pipeline_mode<synchronous>, transform_indices = @transform_3, window_bounds = array<i64: 128, 128>}, {pipeline_mode = #tpu.pipeline_mode<synchronous>, transform_indices = @transform_4, window_bounds = array<i64: 1, 128>}, {transform_indices = @transform_5, window_bounds = array<i64: 1, 1, 128>}, {transform_indices = @transform_6, window_bounds = array<i64: 1, 8, 128>}, {transform_indices = @transform_7, window_bounds = array<i64: 1, 8, 128>}]} {
    %c0 = arith.constant 0 : index
    %c0_0 = arith.constant 0 : index
    %c0_1 = arith.constant 0 : index
    %0 = vector.load %arg2[%c0, %c0_0, %c0_1] : memref<1x8x16xf32, #tpu.memory_space<vmem>>, vector<1x8x16xf32>
    %1 = vector.shape_cast %0 : vector<1x8x16xf32> to vector<8x16xf32>
    %c0_2 = arith.constant 0 : index
    %c0_3 = arith.constant 0 : index
    %2 = vector.load %arg3[%c0_2, %c0_3] : memref<16x128xf32, #tpu.memory_space<vmem>>, vector<16x128xf32>
    %cst = arith.constant dense<0.000000e+00> : vector<8x128xf32>
    %3 = tpu.matmul %1, %2, %cst {dimension_numbers = #tpu.dot_dimension_numbers<[1], [0], [0], [1], [0, 0, 1, 1], [], []>} : vector<8x16xf32>, vector<16x128xf32>, vector<8x128xf32> -> vector<8x128xf32>
    %c0_4 = arith.constant 0 : index
    %c0_5 = arith.constant 0 : index
    %4 = vector.load %arg4[%c0_4, %c0_5] : memref<1x128xf32, #tpu.memory_space<vmem>>, vector<1x128xf32>
    %5 = vector.broadcast %4 : vector<1x128xf32> to vector<8x128xf32>
    %6 = arith.addf %3, %5 : vector<8x128xf32>
    %cst_6 = arith.constant 0.000000e+00 : f32
    %7 = vector.broadcast %cst_6 : f32 to vector<8x128xf32>
    %8 = arith.maximumf %6, %7 : vector<8x128xf32>
    %c0_7 = arith.constant 0 : index
    %c0_8 = arith.constant 0 : index
    %9 = vector.load %arg5[%c0_7, %c0_8] : memref<128x128xf32, #tpu.memory_space<vmem>>, vector<128x128xf32>
    %cst_9 = arith.constant dense<0.000000e+00> : vector<8x128xf32>
    %10 = tpu.matmul %8, %9, %cst_9 {dimension_numbers = #tpu.dot_dimension_numbers<[1], [0], [0], [1], [0, 0, 1, 1], [], []>} : vector<8x128xf32>, vector<128x128xf32>, vector<8x128xf32> -> vector<8x128xf32>
    %c0_10 = arith.constant 0 : index
    %c0_11 = arith.constant 0 : index
    %11 = vector.load %arg6[%c0_10, %c0_11] : memref<1x128xf32, #tpu.memory_space<vmem>>, vector<1x128xf32>
    %12 = vector.broadcast %11 : vector<1x128xf32> to vector<8x128xf32>
    %13 = arith.addf %10, %12 : vector<8x128xf32>
    %c0_12 = arith.constant 0 : index
    %c0_13 = arith.constant 0 : index
    %c0_14 = arith.constant 0 : index
    %14 = vector.load %arg8[%c0_12, %c0_13, %c0_14] : memref<1x8x128xf32, #tpu.memory_space<vmem>>, vector<1x8x128xf32>
    %15 = vector.shape_cast %14 : vector<1x8x128xf32> to vector<8x128xf32>
    %16 = vector.shape_cast %13 : vector<8x128xf32> to vector<1x8x128xf32>
    tpu.vector_store %arg8[%c0_12, %c0_13, %c0_14], %16 {strides = array<i32>} : memref<1x8x128xf32, #tpu.memory_space<vmem>>, vector<1x8x128xf32>,
    %cst_15 = arith.constant dense<0xFF800000> : vector<8xf32>
    %17 = vector.multi_reduction <maximumf>, %13, %cst_15 [1] : vector<8x128xf32> to vector<8xf32>
    %18 = vector.shape_cast %17 : vector<8xf32> to vector<8x1xf32>
    %19 = vector.broadcast %18 : vector<8x1xf32> to vector<8x128xf32>
    %20 = arith.subf %13, %19 : vector<8x128xf32>
    %21 = math.exp %20 : vector<8x128xf32>
    %cst_16 = arith.constant dense<0.000000e+00> : vector<8xf32>
    %22 = vector.multi_reduction <add>, %21, %cst_16 [1] : vector<8x128xf32> to vector<8xf32>
    %23 = vector.shape_cast %22 : vector<8xf32> to vector<8x1xf32>
    %24 = math.log %23 : vector<8x1xf32>
    %25 = arith.addf %24, %18 : vector<8x1xf32>
    %26 = vector.broadcast %25 : vector<8x1xf32> to vector<8x128xf32>
    %27 = arith.subf %13, %26 : vector<8x128xf32>
    %28 = tpu.iota {dimensions = array<i32: 0>} : vector<128x128xi32>
    %c0_17 = arith.constant 0 : index
    %c0_18 = arith.constant 0 : index
    %c0_19 = arith.constant 0 : index
    %29 = vector.load %arg7[%c0_17, %c0_18, %c0_19] : memref<1x1x128xi32, #tpu.memory_space<vmem>>, vector<1x1x128xi32>
    %30 = vector.shape_cast %29 : vector<1x1x128xi32> to vector<1x128xi32>
    %31 = vector.broadcast %30 : vector<1x128xi32> to vector<128x128xi32>
    %32 = arith.cmpi eq, %31, %28 : vector<128x128xi32>
    %cst_20 = arith.constant 1.000000e+00 : f32
    %cst_21 = arith.constant 0.000000e+00 : f32
    %33 = vector.broadcast %cst_20 : f32 to vector<128x128xf32>
    %34 = vector.broadcast %cst_21 : f32 to vector<128x128xf32>
    %35 = arith.select %32, %33, %34 : vector<128x128xi1>, vector<128x128xf32>
    %cst_22 = arith.constant dense<0.000000e+00> : vector<8x128xf32>
    %36 = tpu.matmul %27, %35, %cst_22 {dimension_numbers = #tpu.dot_dimension_numbers<[1], [0], [0], [1], [0, 0, 1, 1], [], []>} : vector<8x128xf32>, vector<128x128xf32>, vector<8x128xf32> -> vector<8x128xf32>
    %c0_23 = arith.constant 0 : index
    %c0_24 = arith.constant 0 : index
    %c0_25 = arith.constant 0 : index
    %37 = vector.load %arg9[%c0_23, %c0_24, %c0_25] : memref<1x8x128xf32, #tpu.memory_space<vmem>>, vector<1x8x128xf32>
    %38 = vector.shape_cast %37 : vector<1x8x128xf32> to vector<8x128xf32>
    %39 = vector.shape_cast %36 : vector<8x128xf32> to vector<1x8x128xf32>
    tpu.vector_store %arg9[%c0_23, %c0_24, %c0_25], %39 {strides = array<i32>} : memref<1x8x128xf32, #tpu.memory_space<vmem>>, vector<1x8x128xf32>,
    return
  }
  func.func @transform_0(%arg0: i32, %arg1: i32) -> (i32, i32, i32) {
    %c0_i32 = arith.constant 0 : i32
    %c0_i32_0 = arith.constant 0 : i32
    return %arg0, %arg1, %c0_i32 : i32, i32, i32
  }
  func.func @transform_1(%arg0: i32, %arg1: i32) -> (i32, i32) {
    %c0_i32 = arith.constant 0 : i32
    %c0_i32_0 = arith.constant 0 : i32
    %c0_i32_1 = arith.constant 0 : i32
    return %c0_i32, %c0_i32_0 : i32, i32
  }
  func.func @transform_2(%arg0: i32, %arg1: i32) -> (i32, i32) {
    %c0_i32 = arith.constant 0 : i32
    %c0_i32_0 = arith.constant 0 : i32
    %c0_i32_1 = arith.constant 0 : i32
    return %c0_i32, %c0_i32_0 : i32, i32
  }
  func.func @transform_3(%arg0: i32, %arg1: i32) -> (i32, i32) {
    %c0_i32 = arith.constant 0 : i32
    %c0_i32_0 = arith.constant 0 : i32
    %c0_i32_1 = arith.constant 0 : i32
    return %c0_i32, %c0_i32_0 : i32, i32
  }
  func.func @transform_4(%arg0: i32, %arg1: i32) -> (i32, i32) {
    %c0_i32 = arith.constant 0 : i32
    %c0_i32_0 = arith.constant 0 : i32
    %c0_i32_1 = arith.constant 0 : i32
    return %c0_i32, %c0_i32_0 : i32, i32
  }
  func.func @transform_5(%arg0: i32, %arg1: i32) -> (i32, i32, i32) {
    %c0_i32 = arith.constant 0 : i32
    %c0_i32_0 = arith.constant 0 : i32
    %c0_i32_1 = arith.constant 0 : i32
    return %arg0, %c0_i32, %c0_i32_0 : i32, i32, i32
  }
  func.func @transform_6(%arg0: i32, %arg1: i32) -> (i32, i32, i32) {
    %c0_i32 = arith.constant 0 : i32
    %c0_i32_0 = arith.constant 0 : i32
    return %arg0, %arg1, %c0_i32 : i32, i32, i32
  }
  func.func @transform_7(%arg0: i32, %arg1: i32) -> (i32, i32, i32) {
    %c0_i32 = arith.constant 0 : i32
    %c0_i32_0 = arith.constant 0 : i32
    return %arg0, %arg1, %c0_i32 : i32, i32, i32
  }
}

module attributes {stable_mosaic.version = 11 : i64} {
  func.func @ctc_alpha_kernel(%arg0: i32, %arg1: memref<2xi32, #tpu.memory_space<smem>>, %arg2: memref<2x8x128xf32, #tpu.memory_space<vmem>>, %arg3: memref<2x128xf32, #tpu.memory_space<vmem>>, %arg4: memref<1x128xf32, #tpu.memory_space<vmem>>, %arg5: memref<2x1xi32, #tpu.memory_space<vmem>>, %arg6: memref<2x128xf32, #tpu.memory_space<vmem>>, %arg7: memref<2x128xf32, #tpu.memory_space<vmem>>) attributes {dimension_semantics = [#tpu.dimension_semantics<arbitrary>], iteration_bounds = array<i64: 1>, scalar_prefetch = 1 : i64, scratch_operands = 1 : i64, tpu.core_type = #tpu.core_type<tc>, window_params = [{transform_indices = @transform_0, window_bounds = array<i64: 2, 8, 128>}, {pipeline_mode = #tpu.pipeline_mode<synchronous>, transform_indices = @transform_1, window_bounds = array<i64: 2, 128>}, {pipeline_mode = #tpu.pipeline_mode<synchronous>, transform_indices = @transform_2, window_bounds = array<i64: 1, 128>}, {pipeline_mode = #tpu.pipeline_mode<synchronous>, transform_indices = @transform_3, window_bounds = array<i64: 2, 1>}, {pipeline_mode = #tpu.pipeline_mode<synchronous>, transform_indices = @transform_4, window_bounds = array<i64: 2, 128>}]} {
    %c8_i32 = arith.constant 8 : i32
    %0 = arith.muli %arg0, %c8_i32 : i32
    %c0 = arith.constant 0 : index
    %1 = memref.load %arg1[%c0] : memref<2xi32, #tpu.memory_space<smem>>
    %c1 = arith.constant 1 : index
    %2 = memref.load %arg1[%c1] : memref<2xi32, #tpu.memory_space<smem>>
    %c0_i32 = arith.constant 0 : i32
    %3 = arith.cmpi eq, %arg0, %c0_i32 : i32
    %4 = arith.extui %3 : i1 to i32
    %c0_i32_0 = arith.constant 0 : i32
    %5 = arith.cmpi ne, %4, %c0_i32_0 : i32
    scf.if %5 {
      %cst = arith.constant -1.000000e+05 : f32
      %24 = vector.broadcast %cst : f32 to vector<2x128xf32>
      %c0_11 = arith.constant 0 : index
      %c0_12 = arith.constant 0 : index
      %25 = vector.load %arg7[%c0_11, %c0_12] : memref<2x128xf32, #tpu.memory_space<vmem>>, vector<2x128xf32>
      tpu.vector_store %arg7[%c0_11, %c0_12], %24 {strides = array<i32>} : memref<2x128xf32, #tpu.memory_space<vmem>>, vector<2x128xf32>,
      %cst_13 = arith.constant -1.000000e+05 : f32
      %26 = vector.broadcast %cst_13 : f32 to vector<2x128xf32>
      %c0_14 = arith.constant 0 : index
      %c0_15 = arith.constant 0 : index
      %27 = vector.load %arg6[%c0_14, %c0_15] : memref<2x128xf32, #tpu.memory_space<vmem>>, vector<2x128xf32>
      tpu.vector_store %arg6[%c0_14, %c0_15], %26 {strides = array<i32>} : memref<2x128xf32, #tpu.memory_space<vmem>>, vector<2x128xf32>,
    } else {
    }
    %6 = arith.cmpi slt, %0, %2 : i32
    %c1_i32 = arith.constant 1 : i32
    %7 = arith.subi %1, %c1_i32 : i32
    %c8_i32_1 = arith.constant 8 : i32
    %8 = arith.addi %0, %c8_i32_1 : i32
    %9 = arith.cmpi slt, %7, %8 : i32
    %c1_i32_2 = arith.constant 1 : i32
    %10 = arith.subi %2, %c1_i32_2 : i32
    %11 = arith.cmpi sge, %10, %0 : i32
    %12 = arith.andi %9, %11 : i1
    %c0_3 = arith.constant 0 : index
    %c0_4 = arith.constant 0 : index
    %13 = vector.load %arg3[%c0_3, %c0_4] : memref<2x128xf32, #tpu.memory_space<vmem>>, vector<2x128xf32>
    %c0_5 = arith.constant 0 : index
    %c0_6 = arith.constant 0 : index
    %14 = vector.load %arg4[%c0_5, %c0_6] : memref<1x128xf32, #tpu.memory_space<vmem>>, vector<1x128xf32>
    %c0_7 = arith.constant 0 : index
    %c0_8 = arith.constant 0 : index
    %15 = vector.load %arg5[%c0_7, %c0_8] : memref<2x1xi32, #tpu.memory_space<vmem>>, vector<2x1xi32>
    %16 = tpu.iota {dimensions = array<i32: 1>} : vector<2x128xi32>
    %17 = arith.andi %6, %12 : i1
    %18 = arith.extui %17 : i1 to i32
    %c0_i32_9 = arith.constant 0 : i32
    %19 = arith.cmpi ne, %18, %c0_i32_9 : i32
    scf.if %19 {
      %c0_i32_11 = arith.constant 0 : i32
      %24 = arith.addi %0, %c0_i32_11 : i32
      %c0_12 = arith.constant 0 : index
      %25 = arith.index_cast %c0_i32_11 : i32 to index
      %c0_13 = arith.constant 0 : index
      %26 = vector.load %arg2[%c0_12, %25, %c0_13] : memref<2x8x128xf32, #tpu.memory_space<vmem>>, vector<2x1x128xf32>
      %27 = vector.shape_cast %26 : vector<2x1x128xf32> to vector<2x128xf32>
      %c0_14 = arith.constant 0 : index
      %c0_15 = arith.constant 0 : index
      %28 = vector.load %arg7[%c0_14, %c0_15] : memref<2x128xf32, #tpu.memory_space<vmem>>, vector<2x128xf32>
      %c1_i32_16 = arith.constant 1 : i32
      %29 = tpu.dynamic_rotate %28 by %c1_i32_16 dim 1 : vector<2x128xf32>, i32 -> vector<2x128xf32>
      %30 = vector.broadcast %14 : vector<1x128xf32> to vector<2x128xf32>
      %31 = arith.addf %29, %30 : vector<2x128xf32>
      %c2_i32 = arith.constant 2 : i32
      %32 = tpu.dynamic_rotate %28 by %c2_i32 dim 1 : vector<2x128xf32>, i32 -> vector<2x128xf32>
      %33 = arith.addf %32, %13 : vector<2x128xf32>
      %34 = arith.maximumf %31, %33 : vector<2x128xf32>
      %35 = arith.maximumf %28, %34 : vector<2x128xf32>
      %36 = arith.subf %28, %35 : vector<2x128xf32>
      %37 = math.exp %36 : vector<2x128xf32>
      %38 = arith.subf %31, %35 : vector<2x128xf32>
      %39 = math.exp %38 : vector<2x128xf32>
      %40 = arith.addf %37, %39 : vector<2x128xf32>
      %41 = arith.subf %33, %35 : vector<2x128xf32>
      %42 = math.exp %41 : vector<2x128xf32>
      %43 = arith.addf %40, %42 : vector<2x128xf32>
      %44 = math.log %43 : vector<2x128xf32>
      %45 = arith.addf %35, %44 : vector<2x128xf32>
      %46 = arith.addf %45, %27 : vector<2x128xf32>
      %c2_i32_17 = arith.constant 2 : i32
      %47 = vector.broadcast %c2_i32_17 : i32 to vector<2x128xi32>
      %48 = arith.cmpi slt, %16, %47 : vector<2x128xi32>
      %cst = arith.constant -1.000000e+05 : f32
      %49 = vector.broadcast %cst : f32 to vector<2x128xf32>
      %50 = arith.select %48, %27, %49 : vector<2x128xi1>, vector<2x128xf32>
      %c0_i32_18 = arith.constant 0 : i32
      %51 = arith.cmpi eq, %24, %c0_i32_18 : i32
      %52 = arith.select %51, %50, %46 : vector<2x128xf32>
      %c0_19 = arith.constant 0 : index
      %c0_20 = arith.constant 0 : index
      %53 = vector.load %arg7[%c0_19, %c0_20] : memref<2x128xf32, #tpu.memory_space<vmem>>, vector<2x128xf32>
      tpu.vector_store %arg7[%c0_19, %c0_20], %52 {strides = array<i32>} : memref<2x128xf32, #tpu.memory_space<vmem>>, vector<2x128xf32>,
      %c1_i32_21 = arith.constant 1 : i32
      %54 = vector.broadcast %c1_i32_21 : i32 to vector<2x1xi32>
      %55 = arith.subi %15, %54 : vector<2x1xi32>
      %56 = vector.broadcast %24 : i32 to vector<2x1xi32>
      %57 = arith.cmpi eq, %56, %55 : vector<2x1xi32>
      %c0_22 = arith.constant 0 : index
      %c0_23 = arith.constant 0 : index
      %58 = vector.load %arg6[%c0_22, %c0_23] : memref<2x128xf32, #tpu.memory_space<vmem>>, vector<2x128xf32>
      %59 = vector.shape_cast %57 : vector<2x1xi1> to vector<2x1xi1>
      %60 = vector.broadcast %59 : vector<2x1xi1> to vector<2x128xi1>
      %61 = arith.select %60, %52, %58 : vector<2x128xi1>, vector<2x128xf32>
      %c0_24 = arith.constant 0 : index
      %c0_25 = arith.constant 0 : index
      %62 = vector.load %arg6[%c0_24, %c0_25] : memref<2x128xf32, #tpu.memory_space<vmem>>, vector<2x128xf32>
      tpu.vector_store %arg6[%c0_24, %c0_25], %61 {strides = array<i32>} : memref<2x128xf32, #tpu.memory_space<vmem>>, vector<2x128xf32>,
      %c1_i32_26 = arith.constant 1 : i32
      %63 = arith.addi %0, %c1_i32_26 : i32
      %c0_27 = arith.constant 0 : index
      %64 = arith.index_cast %c1_i32_26 : i32 to index
      %c0_28 = arith.constant 0 : index
      %65 = vector.load %arg2[%c0_27, %64, %c0_28] : memref<2x8x128xf32, #tpu.memory_space<vmem>>, vector<2x1x128xf32>
      %66 = vector.shape_cast %65 : vector<2x1x128xf32> to vector<2x128xf32>
      %c0_29 = arith.constant 0 : index
      %c0_30 = arith.constant 0 : index
      %67 = vector.load %arg7[%c0_29, %c0_30] : memref<2x128xf32, #tpu.memory_space<vmem>>, vector<2x128xf32>
      %c1_i32_31 = arith.constant 1 : i32
      %68 = tpu.dynamic_rotate %67 by %c1_i32_31 dim 1 : vector<2x128xf32>, i32 -> vector<2x128xf32>
      %69 = vector.broadcast %14 : vector<1x128xf32> to vector<2x128xf32>
      %70 = arith.addf %68, %69 : vector<2x128xf32>
      %c2_i32_32 = arith.constant 2 : i32
      %71 = tpu.dynamic_rotate %67 by %c2_i32_32 dim 1 : vector<2x128xf32>, i32 -> vector<2x128xf32>
      %72 = arith.addf %71, %13 : vector<2x128xf32>
      %73 = arith.maximumf %70, %72 : vector<2x128xf32>
      %74 = arith.maximumf %67, %73 : vector<2x128xf32>
      %75 = arith.subf %67, %74 : vector<2x128xf32>
      %76 = math.exp %75 : vector<2x128xf32>
      %77 = arith.subf %70, %74 : vector<2x128xf32>
      %78 = math.exp %77 : vector<2x128xf32>
      %79 = arith.addf %76, %78 : vector<2x128xf32>
      %80 = arith.subf %72, %74 : vector<2x128xf32>
      %81 = math.exp %80 : vector<2x128xf32>
      %82 = arith.addf %79, %81 : vector<2x128xf32>
      %83 = math.log %82 : vector<2x128xf32>
      %84 = arith.addf %74, %83 : vector<2x128xf32>
      %85 = arith.addf %84, %66 : vector<2x128xf32>
      %c2_i32_33 = arith.constant 2 : i32
      %86 = vector.broadcast %c2_i32_33 : i32 to vector<2x128xi32>
      %87 = arith.cmpi slt, %16, %86 : vector<2x128xi32>
      %cst_34 = arith.constant -1.000000e+05 : f32
      %88 = vector.broadcast %cst_34 : f32 to vector<2x128xf32>
      %89 = arith.select %87, %66, %88 : vector<2x128xi1>, vector<2x128xf32>
      %c0_i32_35 = arith.constant 0 : i32
      %90 = arith.cmpi eq, %63, %c0_i32_35 : i32
      %91 = arith.select %90, %89, %85 : vector<2x128xf32>
      %c0_36 = arith.constant 0 : index
      %c0_37 = arith.constant 0 : index
      %92 = vector.load %arg7[%c0_36, %c0_37] : memref<2x128xf32, #tpu.memory_space<vmem>>, vector<2x128xf32>
      tpu.vector_store %arg7[%c0_36, %c0_37], %91 {strides = array<i32>} : memref<2x128xf32, #tpu.memory_space<vmem>>, vector<2x128xf32>,
      %c1_i32_38 = arith.constant 1 : i32
      %93 = vector.broadcast %c1_i32_38 : i32 to vector<2x1xi32>
      %94 = arith.subi %15, %93 : vector<2x1xi32>
      %95 = vector.broadcast %63 : i32 to vector<2x1xi32>
      %96 = arith.cmpi eq, %95, %94 : vector<2x1xi32>
      %c0_39 = arith.constant 0 : index
      %c0_40 = arith.constant 0 : index
      %97 = vector.load %arg6[%c0_39, %c0_40] : memref<2x128xf32, #tpu.memory_space<vmem>>, vector<2x128xf32>
      %98 = vector.shape_cast %96 : vector<2x1xi1> to vector<2x1xi1>
      %99 = vector.broadcast %98 : vector<2x1xi1> to vector<2x128xi1>
      %100 = arith.select %99, %91, %97 : vector<2x128xi1>, vector<2x128xf32>
      %c0_41 = arith.constant 0 : index
      %c0_42 = arith.constant 0 : index
      %101 = vector.load %arg6[%c0_41, %c0_42] : memref<2x128xf32, #tpu.memory_space<vmem>>, vector<2x128xf32>
      tpu.vector_store %arg6[%c0_41, %c0_42], %100 {strides = array<i32>} : memref<2x128xf32, #tpu.memory_space<vmem>>, vector<2x128xf32>,
      %c2_i32_43 = arith.constant 2 : i32
      %102 = arith.addi %0, %c2_i32_43 : i32
      %c0_44 = arith.constant 0 : index
      %103 = arith.index_cast %c2_i32_43 : i32 to index
      %c0_45 = arith.constant 0 : index
      %104 = vector.load %arg2[%c0_44, %103, %c0_45] : memref<2x8x128xf32, #tpu.memory_space<vmem>>, vector<2x1x128xf32>
      %105 = vector.shape_cast %104 : vector<2x1x128xf32> to vector<2x128xf32>
      %c0_46 = arith.constant 0 : index
      %c0_47 = arith.constant 0 : index
      %106 = vector.load %arg7[%c0_46, %c0_47] : memref<2x128xf32, #tpu.memory_space<vmem>>, vector<2x128xf32>
      %c1_i32_48 = arith.constant 1 : i32
      %107 = tpu.dynamic_rotate %106 by %c1_i32_48 dim 1 : vector<2x128xf32>, i32 -> vector<2x128xf32>
      %108 = vector.broadcast %14 : vector<1x128xf32> to vector<2x128xf32>
      %109 = arith.addf %107, %108 : vector<2x128xf32>
      %c2_i32_49 = arith.constant 2 : i32
      %110 = tpu.dynamic_rotate %106 by %c2_i32_49 dim 1 : vector<2x128xf32>, i32 -> vector<2x128xf32>
      %111 = arith.addf %110, %13 : vector<2x128xf32>
      %112 = arith.maximumf %109, %111 : vector<2x128xf32>
      %113 = arith.maximumf %106, %112 : vector<2x128xf32>
      %114 = arith.subf %106, %113 : vector<2x128xf32>
      %115 = math.exp %114 : vector<2x128xf32>
      %116 = arith.subf %109, %113 : vector<2x128xf32>
      %117 = math.exp %116 : vector<2x128xf32>
      %118 = arith.addf %115, %117 : vector<2x128xf32>
      %119 = arith.subf %111, %113 : vector<2x128xf32>
      %120 = math.exp %119 : vector<2x128xf32>
      %121 = arith.addf %118, %120 : vector<2x128xf32>
      %122 = math.log %121 : vector<2x128xf32>
      %123 = arith.addf %113, %122 : vector<2x128xf32>
      %124 = arith.addf %123, %105 : vector<2x128xf32>
      %c2_i32_50 = arith.constant 2 : i32
      %125 = vector.broadcast %c2_i32_50 : i32 to vector<2x128xi32>
      %126 = arith.cmpi slt, %16, %125 : vector<2x128xi32>
      %cst_51 = arith.constant -1.000000e+05 : f32
      %127 = vector.broadcast %cst_51 : f32 to vector<2x128xf32>
      %128 = arith.select %126, %105, %127 : vector<2x128xi1>, vector<2x128xf32>
      %c0_i32_52 = arith.constant 0 : i32
      %129 = arith.cmpi eq, %102, %c0_i32_52 : i32
      %130 = arith.select %129, %128, %124 : vector<2x128xf32>
      %c0_53 = arith.constant 0 : index
      %c0_54 = arith.constant 0 : index
      %131 = vector.load %arg7[%c0_53, %c0_54] : memref<2x128xf32, #tpu.memory_space<vmem>>, vector<2x128xf32>
      tpu.vector_store %arg7[%c0_53, %c0_54], %130 {strides = array<i32>} : memref<2x128xf32, #tpu.memory_space<vmem>>, vector<2x128xf32>,
      %c1_i32_55 = arith.constant 1 : i32
      %132 = vector.broadcast %c1_i32_55 : i32 to vector<2x1xi32>
      %133 = arith.subi %15, %132 : vector<2x1xi32>
      %134 = vector.broadcast %102 : i32 to vector<2x1xi32>
      %135 = arith.cmpi eq, %134, %133 : vector<2x1xi32>
      %c0_56 = arith.constant 0 : index
      %c0_57 = arith.constant 0 : index
      %136 = vector.load %arg6[%c0_56, %c0_57] : memref<2x128xf32, #tpu.memory_space<vmem>>, vector<2x128xf32>
      %137 = vector.shape_cast %135 : vector<2x1xi1> to vector<2x1xi1>
      %138 = vector.broadcast %137 : vector<2x1xi1> to vector<2x128xi1>
      %139 = arith.select %138, %130, %136 : vector<2x128xi1>, vector<2x128xf32>
      %c0_58 = arith.constant 0 : index
      %c0_59 = arith.constant 0 : index
      %140 = vector.load %arg6[%c0_58, %c0_59] : memref<2x128xf32, #tpu.memory_space<vmem>>, vector<2x128xf32>
      tpu.vector_store %arg6[%c0_58, %c0_59], %139 {strides = array<i32>} : memref<2x128xf32, #tpu.memory_space<vmem>>, vector<2x128xf32>,
      %c3_i32 = arith.constant 3 : i32
      %141 = arith.addi %0, %c3_i32 : i32
      %c0_60 = arith.constant 0 : index
      %142 = arith.index_cast %c3_i32 : i32 to index
      %c0_61 = arith.constant 0 : index
      %143 = vector.load %arg2[%c0_60, %142, %c0_61] : memref<2x8x128xf32, #tpu.memory_space<vmem>>, vector<2x1x128xf32>
      %144 = vector.shape_cast %143 : vector<2x1x128xf32> to vector<2x128xf32>
      %c0_62 = arith.constant 0 : index
      %c0_63 = arith.constant 0 : index
      %145 = vector.load %arg7[%c0_62, %c0_63] : memref<2x128xf32, #tpu.memory_space<vmem>>, vector<2x128xf32>
      %c1_i32_64 = arith.constant 1 : i32
      %146 = tpu.dynamic_rotate %145 by %c1_i32_64 dim 1 : vector<2x128xf32>, i32 -> vector<2x128xf32>
      %147 = vector.broadcast %14 : vector<1x128xf32> to vector<2x128xf32>
      %148 = arith.addf %146, %147 : vector<2x128xf32>
      %c2_i32_65 = arith.constant 2 : i32
      %149 = tpu.dynamic_rotate %145 by %c2_i32_65 dim 1 : vector<2x128xf32>, i32 -> vector<2x128xf32>
      %150 = arith.addf %149, %13 : vector<2x128xf32>
      %151 = arith.maximumf %148, %150 : vector<2x128xf32>
      %152 = arith.maximumf %145, %151 : vector<2x128xf32>
      %153 = arith.subf %145, %152 : vector<2x128xf32>
      %154 = math.exp %153 : vector<2x128xf32>
      %155 = arith.subf %148, %152 : vector<2x128xf32>
      %156 = math.exp %155 : vector<2x128xf32>
      %157 = arith.addf %154, %156 : vector<2x128xf32>
      %158 = arith.subf %150, %152 : vector<2x128xf32>
      %159 = math.exp %158 : vector<2x128xf32>
      %160 = arith.addf %157, %159 : vector<2x128xf32>
      %161 = math.log %160 : vector<2x128xf32>
      %162 = arith.addf %152, %161 : vector<2x128xf32>
      %163 = arith.addf %162, %144 : vector<2x128xf32>
      %c2_i32_66 = arith.constant 2 : i32
      %164 = vector.broadcast %c2_i32_66 : i32 to vector<2x128xi32>
      %165 = arith.cmpi slt, %16, %164 : vector<2x128xi32>
      %cst_67 = arith.constant -1.000000e+05 : f32
      %166 = vector.broadcast %cst_67 : f32 to vector<2x128xf32>
      %167 = arith.select %165, %144, %166 : vector<2x128xi1>, vector<2x128xf32>
      %c0_i32_68 = arith.constant 0 : i32
      %168 = arith.cmpi eq, %141, %c0_i32_68 : i32
      %169 = arith.select %168, %167, %163 : vector<2x128xf32>
      %c0_69 = arith.constant 0 : index
      %c0_70 = arith.constant 0 : index
      %170 = vector.load %arg7[%c0_69, %c0_70] : memref<2x128xf32, #tpu.memory_space<vmem>>, vector<2x128xf32>
      tpu.vector_store %arg7[%c0_69, %c0_70], %169 {strides = array<i32>} : memref<2x128xf32, #tpu.memory_space<vmem>>, vector<2x128xf32>,
      %c1_i32_71 = arith.constant 1 : i32
      %171 = vector.broadcast %c1_i32_71 : i32 to vector<2x1xi32>
      %172 = arith.subi %15, %171 : vector<2x1xi32>
      %173 = vector.broadcast %141 : i32 to vector<2x1xi32>
      %174 = arith.cmpi eq, %173, %172 : vector<2x1xi32>
      %c0_72 = arith.constant 0 : index
      %c0_73 = arith.constant 0 : index
      %175 = vector.load %arg6[%c0_72, %c0_73] : memref<2x128xf32, #tpu.memory_space<vmem>>, vector<2x128xf32>
      %176 = vector.shape_cast %174 : vector<2x1xi1> to vector<2x1xi1>
      %177 = vector.broadcast %176 : vector<2x1xi1> to vector<2x128xi1>
      %178 = arith.select %177, %169, %175 : vector<2x128xi1>, vector<2x128xf32>
      %c0_74 = arith.constant 0 : index
      %c0_75 = arith.constant 0 : index
      %179 = vector.load %arg6[%c0_74, %c0_75] : memref<2x128xf32, #tpu.memory_space<vmem>>, vector<2x128xf32>
      tpu.vector_store %arg6[%c0_74, %c0_75], %178 {strides = array<i32>} : memref<2x128xf32, #tpu.memory_space<vmem>>, vector<2x128xf32>,
      %c4_i32 = arith.constant 4 : i32
      %180 = arith.addi %0, %c4_i32 : i32
      %c0_76 = arith.constant 0 : index
      %181 = arith.index_cast %c4_i32 : i32 to index
      %c0_77 = arith.constant 0 : index
      %182 = vector.load %arg2[%c0_76, %181, %c0_77] : memref<2x8x128xf32, #tpu.memory_space<vmem>>, vector<2x1x128xf32>
      %183 = vector.shape_cast %182 : vector<2x1x128xf32> to vector<2x128xf32>
      %c0_78 = arith.constant 0 : index
      %c0_79 = arith.constant 0 : index
      %184 = vector.load %arg7[%c0_78, %c0_79] : memref<2x128xf32, #tpu.memory_space<vmem>>, vector<2x128xf32>
      %c1_i32_80 = arith.constant 1 : i32
      %185 = tpu.dynamic_rotate %184 by %c1_i32_80 dim 1 : vector<2x128xf32>, i32 -> vector<2x128xf32>
      %186 = vector.broadcast %14 : vector<1x128xf32> to vector<2x128xf32>
      %187 = arith.addf %185, %186 : vector<2x128xf32>
      %c2_i32_81 = arith.constant 2 : i32
      %188 = tpu.dynamic_rotate %184 by %c2_i32_81 dim 1 : vector<2x128xf32>, i32 -> vector<2x128xf32>
      %189 = arith.addf %188, %13 : vector<2x128xf32>
      %190 = arith.maximumf %187, %189 : vector<2x128xf32>
      %191 = arith.maximumf %184, %190 : vector<2x128xf32>
      %192 = arith.subf %184, %191 : vector<2x128xf32>
      %193 = math.exp %192 : vector<2x128xf32>
      %194 = arith.subf %187, %191 : vector<2x128xf32>
      %195 = math.exp %194 : vector<2x128xf32>
      %196 = arith.addf %193, %195 : vector<2x128xf32>
      %197 = arith.subf %189, %191 : vector<2x128xf32>
      %198 = math.exp %197 : vector<2x128xf32>
      %199 = arith.addf %196, %198 : vector<2x128xf32>
      %200 = math.log %199 : vector<2x128xf32>
      %201 = arith.addf %191, %200 : vector<2x128xf32>
      %202 = arith.addf %201, %183 : vector<2x128xf32>
      %c2_i32_82 = arith.constant 2 : i32
      %203 = vector.broadcast %c2_i32_82 : i32 to vector<2x128xi32>
      %204 = arith.cmpi slt, %16, %203 : vector<2x128xi32>
      %cst_83 = arith.constant -1.000000e+05 : f32
      %205 = vector.broadcast %cst_83 : f32 to vector<2x128xf32>
      %206 = arith.select %204, %183, %205 : vector<2x128xi1>, vector<2x128xf32>
      %c0_i32_84 = arith.constant 0 : i32
      %207 = arith.cmpi eq, %180, %c0_i32_84 : i32
      %208 = arith.select %207, %206, %202 : vector<2x128xf32>
      %c0_85 = arith.constant 0 : index
      %c0_86 = arith.constant 0 : index
      %209 = vector.load %arg7[%c0_85, %c0_86] : memref<2x128xf32, #tpu.memory_space<vmem>>, vector<2x128xf32>
      tpu.vector_store %arg7[%c0_85, %c0_86], %208 {strides = array<i32>} : memref<2x128xf32, #tpu.memory_space<vmem>>, vector<2x128xf32>,
      %c1_i32_87 = arith.constant 1 : i32
      %210 = vector.broadcast %c1_i32_87 : i32 to vector<2x1xi32>
      %211 = arith.subi %15, %210 : vector<2x1xi32>
      %212 = vector.broadcast %180 : i32 to vector<2x1xi32>
      %213 = arith.cmpi eq, %212, %211 : vector<2x1xi32>
      %c0_88 = arith.constant 0 : index
      %c0_89 = arith.constant 0 : index
      %214 = vector.load %arg6[%c0_88, %c0_89] : memref<2x128xf32, #tpu.memory_space<vmem>>, vector<2x128xf32>
      %215 = vector.shape_cast %213 : vector<2x1xi1> to vector<2x1xi1>
      %216 = vector.broadcast %215 : vector<2x1xi1> to vector<2x128xi1>
      %217 = arith.select %216, %208, %214 : vector<2x128xi1>, vector<2x128xf32>
      %c0_90 = arith.constant 0 : index
      %c0_91 = arith.constant 0 : index
      %218 = vector.load %arg6[%c0_90, %c0_91] : memref<2x128xf32, #tpu.memory_space<vmem>>, vector<2x128xf32>
      tpu.vector_store %arg6[%c0_90, %c0_91], %217 {strides = array<i32>} : memref<2x128xf32, #tpu.memory_space<vmem>>, vector<2x128xf32>,
      %c5_i32 = arith.constant 5 : i32
      %219 = arith.addi %0, %c5_i32 : i32
      %c0_92 = arith.constant 0 : index
      %220 = arith.index_cast %c5_i32 : i32 to index
      %c0_93 = arith.constant 0 : index
      %221 = vector.load %arg2[%c0_92, %220, %c0_93] : memref<2x8x128xf32, #tpu.memory_space<vmem>>, vector<2x1x128xf32>
      %222 = vector.shape_cast %221 : vector<2x1x128xf32> to vector<2x128xf32>
      %c0_94 = arith.constant 0 : index
      %c0_95 = arith.constant 0 : index
      %223 = vector.load %arg7[%c0_94, %c0_95] : memref<2x128xf32, #tpu.memory_space<vmem>>, vector<2x128xf32>
      %c1_i32_96 = arith.constant 1 : i32
      %224 = tpu.dynamic_rotate %223 by %c1_i32_96 dim 1 : vector<2x128xf32>, i32 -> vector<2x128xf32>
      %225 = vector.broadcast %14 : vector<1x128xf32> to vector<2x128xf32>
      %226 = arith.addf %224, %225 : vector<2x128xf32>
      %c2_i32_97 = arith.constant 2 : i32
      %227 = tpu.dynamic_rotate %223 by %c2_i32_97 dim 1 : vector<2x128xf32>, i32 -> vector<2x128xf32>
      %228 = arith.addf %227, %13 : vector<2x128xf32>
      %229 = arith.maximumf %226, %228 : vector<2x128xf32>
      %230 = arith.maximumf %223, %229 : vector<2x128xf32>
      %231 = arith.subf %223, %230 : vector<2x128xf32>
      %232 = math.exp %231 : vector<2x128xf32>
      %233 = arith.subf %226, %230 : vector<2x128xf32>
      %234 = math.exp %233 : vector<2x128xf32>
      %235 = arith.addf %232, %234 : vector<2x128xf32>
      %236 = arith.subf %228, %230 : vector<2x128xf32>
      %237 = math.exp %236 : vector<2x128xf32>
      %238 = arith.addf %235, %237 : vector<2x128xf32>
      %239 = math.log %238 : vector<2x128xf32>
      %240 = arith.addf %230, %239 : vector<2x128xf32>
      %241 = arith.addf %240, %222 : vector<2x128xf32>
      %c2_i32_98 = arith.constant 2 : i32
      %242 = vector.broadcast %c2_i32_98 : i32 to vector<2x128xi32>
      %243 = arith.cmpi slt, %16, %242 : vector<2x128xi32>
      %cst_99 = arith.constant -1.000000e+05 : f32
      %244 = vector.broadcast %cst_99 : f32 to vector<2x128xf32>
      %245 = arith.select %243, %222, %244 : vector<2x128xi1>, vector<2x128xf32>
      %c0_i32_100 = arith.constant 0 : i32
      %246 = arith.cmpi eq, %219, %c0_i32_100 : i32
      %247 = arith.select %246, %245, %241 : vector<2x128xf32>
      %c0_101 = arith.constant 0 : index
      %c0_102 = arith.constant 0 : index
      %248 = vector.load %arg7[%c0_101, %c0_102] : memref<2x128xf32, #tpu.memory_space<vmem>>, vector<2x128xf32>
      tpu.vector_store %arg7[%c0_101, %c0_102], %247 {strides = array<i32>} : memref<2x128xf32, #tpu.memory_space<vmem>>, vector<2x128xf32>,
      %c1_i32_103 = arith.constant 1 : i32
      %249 = vector.broadcast %c1_i32_103 : i32 to vector<2x1xi32>
      %250 = arith.subi %15, %249 : vector<2x1xi32>
      %251 = vector.broadcast %219 : i32 to vector<2x1xi32>
      %252 = arith.cmpi eq, %251, %250 : vector<2x1xi32>
      %c0_104 = arith.constant 0 : index
      %c0_105 = arith.constant 0 : index
      %253 = vector.load %arg6[%c0_104, %c0_105] : memref<2x128xf32, #tpu.memory_space<vmem>>, vector<2x128xf32>
      %254 = vector.shape_cast %252 : vector<2x1xi1> to vector<2x1xi1>
      %255 = vector.broadcast %254 : vector<2x1xi1> to vector<2x128xi1>
      %256 = arith.select %255, %247, %253 : vector<2x128xi1>, vector<2x128xf32>
      %c0_106 = arith.constant 0 : index
      %c0_107 = arith.constant 0 : index
      %257 = vector.load %arg6[%c0_106, %c0_107] : memref<2x128xf32, #tpu.memory_space<vmem>>, vector<2x128xf32>
      tpu.vector_store %arg6[%c0_106, %c0_107], %256 {strides = array<i32>} : memref<2x128xf32, #tpu.memory_space<vmem>>, vector<2x128xf32>,
      %c6_i32 = arith.constant 6 : i32
      %258 = arith.addi %0, %c6_i32 : i32
      %c0_108 = arith.constant 0 : index
      %259 = arith.index_cast %c6_i32 : i32 to index
      %c0_109 = arith.constant 0 : index
      %260 = vector.load %arg2[%c0_108, %259, %c0_109] : memref<2x8x128xf32, #tpu.memory_space<vmem>>, vector<2x1x128xf32>
      %261 = vector.shape_cast %260 : vector<2x1x128xf32> to vector<2x128xf32>
      %c0_110 = arith.constant 0 : index
      %c0_111 = arith.constant 0 : index
      %262 = vector.load %arg7[%c0_110, %c0_111] : memref<2x128xf32, #tpu.memory_space<vmem>>, vector<2x128xf32>
      %c1_i32_112 = arith.constant 1 : i32
      %263 = tpu.dynamic_rotate %262 by %c1_i32_112 dim 1 : vector<2x128xf32>, i32 -> vector<2x128xf32>
      %264 = vector.broadcast %14 : vector<1x128xf32> to vector<2x128xf32>
      %265 = arith.addf %263, %264 : vector<2x128xf32>
      %c2_i32_113 = arith.constant 2 : i32
      %266 = tpu.dynamic_rotate %262 by %c2_i32_113 dim 1 : vector<2x128xf32>, i32 -> vector<2x128xf32>
      %267 = arith.addf %266, %13 : vector<2x128xf32>
      %268 = arith.maximumf %265, %267 : vector<2x128xf32>
      %269 = arith.maximumf %262, %268 : vector<2x128xf32>
      %270 = arith.subf %262, %269 : vector<2x128xf32>
      %271 = math.exp %270 : vector<2x128xf32>
      %272 = arith.subf %265, %269 : vector<2x128xf32>
      %273 = math.exp %272 : vector<2x128xf32>
      %274 = arith.addf %271, %273 : vector<2x128xf32>
      %275 = arith.subf %267, %269 : vector<2x128xf32>
      %276 = math.exp %275 : vector<2x128xf32>
      %277 = arith.addf %274, %276 : vector<2x128xf32>
      %278 = math.log %277 : vector<2x128xf32>
      %279 = arith.addf %269, %278 : vector<2x128xf32>
      %280 = arith.addf %279, %261 : vector<2x128xf32>
      %c2_i32_114 = arith.constant 2 : i32
      %281 = vector.broadcast %c2_i32_114 : i32 to vector<2x128xi32>
      %282 = arith.cmpi slt, %16, %281 : vector<2x128xi32>
      %cst_115 = arith.constant -1.000000e+05 : f32
      %283 = vector.broadcast %cst_115 : f32 to vector<2x128xf32>
      %284 = arith.select %282, %261, %283 : vector<2x128xi1>, vector<2x128xf32>
      %c0_i32_116 = arith.constant 0 : i32
      %285 = arith.cmpi eq, %258, %c0_i32_116 : i32
      %286 = arith.select %285, %284, %280 : vector<2x128xf32>
      %c0_117 = arith.constant 0 : index
      %c0_118 = arith.constant 0 : index
      %287 = vector.load %arg7[%c0_117, %c0_118] : memref<2x128xf32, #tpu.memory_space<vmem>>, vector<2x128xf32>
      tpu.vector_store %arg7[%c0_117, %c0_118], %286 {strides = array<i32>} : memref<2x128xf32, #tpu.memory_space<vmem>>, vector<2x128xf32>,
      %c1_i32_119 = arith.constant 1 : i32
      %288 = vector.broadcast %c1_i32_119 : i32 to vector<2x1xi32>
      %289 = arith.subi %15, %288 : vector<2x1xi32>
      %290 = vector.broadcast %258 : i32 to vector<2x1xi32>
      %291 = arith.cmpi eq, %290, %289 : vector<2x1xi32>
      %c0_120 = arith.constant 0 : index
      %c0_121 = arith.constant 0 : index
      %292 = vector.load %arg6[%c0_120, %c0_121] : memref<2x128xf32, #tpu.memory_space<vmem>>, vector<2x128xf32>
      %293 = vector.shape_cast %291 : vector<2x1xi1> to vector<2x1xi1>
      %294 = vector.broadcast %293 : vector<2x1xi1> to vector<2x128xi1>
      %295 = arith.select %294, %286, %292 : vector<2x128xi1>, vector<2x128xf32>
      %c0_122 = arith.constant 0 : index
      %c0_123 = arith.constant 0 : index
      %296 = vector.load %arg6[%c0_122, %c0_123] : memref<2x128xf32, #tpu.memory_space<vmem>>, vector<2x128xf32>
      tpu.vector_store %arg6[%c0_122, %c0_123], %295 {strides = array<i32>} : memref<2x128xf32, #tpu.memory_space<vmem>>, vector<2x128xf32>,
      %c7_i32 = arith.constant 7 : i32
      %297 = arith.addi %0, %c7_i32 : i32
      %c0_124 = arith.constant 0 : index
      %298 = arith.index_cast %c7_i32 : i32 to index
      %c0_125 = arith.constant 0 : index
      %299 = vector.load %arg2[%c0_124, %298, %c0_125] : memref<2x8x128xf32, #tpu.memory_space<vmem>>, vector<2x1x128xf32>
      %300 = vector.shape_cast %299 : vector<2x1x128xf32> to vector<2x128xf32>
      %c0_126 = arith.constant 0 : index
      %c0_127 = arith.constant 0 : index
      %301 = vector.load %arg7[%c0_126, %c0_127] : memref<2x128xf32, #tpu.memory_space<vmem>>, vector<2x128xf32>
      %c1_i32_128 = arith.constant 1 : i32
      %302 = tpu.dynamic_rotate %301 by %c1_i32_128 dim 1 : vector<2x128xf32>, i32 -> vector<2x128xf32>
      %303 = vector.broadcast %14 : vector<1x128xf32> to vector<2x128xf32>
      %304 = arith.addf %302, %303 : vector<2x128xf32>
      %c2_i32_129 = arith.constant 2 : i32
      %305 = tpu.dynamic_rotate %301 by %c2_i32_129 dim 1 : vector<2x128xf32>, i32 -> vector<2x128xf32>
      %306 = arith.addf %305, %13 : vector<2x128xf32>
      %307 = arith.maximumf %304, %306 : vector<2x128xf32>
      %308 = arith.maximumf %301, %307 : vector<2x128xf32>
      %309 = arith.subf %301, %308 : vector<2x128xf32>
      %310 = math.exp %309 : vector<2x128xf32>
      %311 = arith.subf %304, %308 : vector<2x128xf32>
      %312 = math.exp %311 : vector<2x128xf32>
      %313 = arith.addf %310, %312 : vector<2x128xf32>
      %314 = arith.subf %306, %308 : vector<2x128xf32>
      %315 = math.exp %314 : vector<2x128xf32>
      %316 = arith.addf %313, %315 : vector<2x128xf32>
      %317 = math.log %316 : vector<2x128xf32>
      %318 = arith.addf %308, %317 : vector<2x128xf32>
      %319 = arith.addf %318, %300 : vector<2x128xf32>
      %c2_i32_130 = arith.constant 2 : i32
      %320 = vector.broadcast %c2_i32_130 : i32 to vector<2x128xi32>
      %321 = arith.cmpi slt, %16, %320 : vector<2x128xi32>
      %cst_131 = arith.constant -1.000000e+05 : f32
      %322 = vector.broadcast %cst_131 : f32 to vector<2x128xf32>
      %323 = arith.select %321, %300, %322 : vector<2x128xi1>, vector<2x128xf32>
      %c0_i32_132 = arith.constant 0 : i32
      %324 = arith.cmpi eq, %297, %c0_i32_132 : i32
      %325 = arith.select %324, %323, %319 : vector<2x128xf32>
      %c0_133 = arith.constant 0 : index
      %c0_134 = arith.constant 0 : index
      %326 = vector.load %arg7[%c0_133, %c0_134] : memref<2x128xf32, #tpu.memory_space<vmem>>, vector<2x128xf32>
      tpu.vector_store %arg7[%c0_133, %c0_134], %325 {strides = array<i32>} : memref<2x128xf32, #tpu.memory_space<vmem>>, vector<2x128xf32>,
      %c1_i32_135 = arith.constant 1 : i32
      %327 = vector.broadcast %c1_i32_135 : i32 to vector<2x1xi32>
      %328 = arith.subi %15, %327 : vector<2x1xi32>
      %329 = vector.broadcast %297 : i32 to vector<2x1xi32>
      %330 = arith.cmpi eq, %329, %328 : vector<2x1xi32>
      %c0_136 = arith.constant 0 : index
      %c0_137 = arith.constant 0 : index
      %331 = vector.load %arg6[%c0_136, %c0_137] : memref<2x128xf32, #tpu.memory_space<vmem>>, vector<2x128xf32>
      %332 = vector.shape_cast %330 : vector<2x1xi1> to vector<2x1xi1>
      %333 = vector.broadcast %332 : vector<2x1xi1> to vector<2x128xi1>
      %334 = arith.select %333, %325, %331 : vector<2x128xi1>, vector<2x128xf32>
      %c0_138 = arith.constant 0 : index
      %c0_139 = arith.constant 0 : index
      %335 = vector.load %arg6[%c0_138, %c0_139] : memref<2x128xf32, #tpu.memory_space<vmem>>, vector<2x128xf32>
      tpu.vector_store %arg6[%c0_138, %c0_139], %334 {strides = array<i32>} : memref<2x128xf32, #tpu.memory_space<vmem>>, vector<2x128xf32>,
      %c8_i32_140 = arith.constant 8 : i32
    } else {
    }
    %true = arith.constant true
    %20 = arith.xori %12, %true : i1
    %21 = arith.andi %6, %20 : i1
    %22 = arith.extui %21 : i1 to i32
    %c0_i32_10 = arith.constant 0 : i32
    %23 = arith.cmpi ne, %22, %c0_i32_10 : i32
    scf.if %23 {
      %c0_i32_11 = arith.constant 0 : i32
      %24 = arith.addi %0, %c0_i32_11 : i32
      %c0_12 = arith.constant 0 : index
      %25 = arith.index_cast %c0_i32_11 : i32 to index
      %c0_13 = arith.constant 0 : index
      %26 = vector.load %arg2[%c0_12, %25, %c0_13] : memref<2x8x128xf32, #tpu.memory_space<vmem>>, vector<2x1x128xf32>
      %27 = vector.shape_cast %26 : vector<2x1x128xf32> to vector<2x128xf32>
      %c0_14 = arith.constant 0 : index
      %c0_15 = arith.constant 0 : index
      %28 = vector.load %arg7[%c0_14, %c0_15] : memref<2x128xf32, #tpu.memory_space<vmem>>, vector<2x128xf32>
      %c1_i32_16 = arith.constant 1 : i32
      %29 = tpu.dynamic_rotate %28 by %c1_i32_16 dim 1 : vector<2x128xf32>, i32 -> vector<2x128xf32>
      %30 = vector.broadcast %14 : vector<1x128xf32> to vector<2x128xf32>
      %31 = arith.addf %29, %30 : vector<2x128xf32>
      %c2_i32 = arith.constant 2 : i32
      %32 = tpu.dynamic_rotate %28 by %c2_i32 dim 1 : vector<2x128xf32>, i32 -> vector<2x128xf32>
      %33 = arith.addf %32, %13 : vector<2x128xf32>
      %34 = arith.maximumf %31, %33 : vector<2x128xf32>
      %35 = arith.maximumf %28, %34 : vector<2x128xf32>
      %36 = arith.subf %28, %35 : vector<2x128xf32>
      %37 = math.exp %36 : vector<2x128xf32>
      %38 = arith.subf %31, %35 : vector<2x128xf32>
      %39 = math.exp %38 : vector<2x128xf32>
      %40 = arith.addf %37, %39 : vector<2x128xf32>
      %41 = arith.subf %33, %35 : vector<2x128xf32>
      %42 = math.exp %41 : vector<2x128xf32>
      %43 = arith.addf %40, %42 : vector<2x128xf32>
      %44 = math.log %43 : vector<2x128xf32>
      %45 = arith.addf %35, %44 : vector<2x128xf32>
      %46 = arith.addf %45, %27 : vector<2x128xf32>
      %c2_i32_17 = arith.constant 2 : i32
      %47 = vector.broadcast %c2_i32_17 : i32 to vector<2x128xi32>
      %48 = arith.cmpi slt, %16, %47 : vector<2x128xi32>
      %cst = arith.constant -1.000000e+05 : f32
      %49 = vector.broadcast %cst : f32 to vector<2x128xf32>
      %50 = arith.select %48, %27, %49 : vector<2x128xi1>, vector<2x128xf32>
      %c0_i32_18 = arith.constant 0 : i32
      %51 = arith.cmpi eq, %24, %c0_i32_18 : i32
      %52 = arith.select %51, %50, %46 : vector<2x128xf32>
      %c0_19 = arith.constant 0 : index
      %c0_20 = arith.constant 0 : index
      %53 = vector.load %arg7[%c0_19, %c0_20] : memref<2x128xf32, #tpu.memory_space<vmem>>, vector<2x128xf32>
      tpu.vector_store %arg7[%c0_19, %c0_20], %52 {strides = array<i32>} : memref<2x128xf32, #tpu.memory_space<vmem>>, vector<2x128xf32>,
      %c1_i32_21 = arith.constant 1 : i32
      %54 = arith.addi %0, %c1_i32_21 : i32
      %c0_22 = arith.constant 0 : index
      %55 = arith.index_cast %c1_i32_21 : i32 to index
      %c0_23 = arith.constant 0 : index
      %56 = vector.load %arg2[%c0_22, %55, %c0_23] : memref<2x8x128xf32, #tpu.memory_space<vmem>>, vector<2x1x128xf32>
      %57 = vector.shape_cast %56 : vector<2x1x128xf32> to vector<2x128xf32>
      %c0_24 = arith.constant 0 : index
      %c0_25 = arith.constant 0 : index
      %58 = vector.load %arg7[%c0_24, %c0_25] : memref<2x128xf32, #tpu.memory_space<vmem>>, vector<2x128xf32>
      %c1_i32_26 = arith.constant 1 : i32
      %59 = tpu.dynamic_rotate %58 by %c1_i32_26 dim 1 : vector<2x128xf32>, i32 -> vector<2x128xf32>
      %60 = vector.broadcast %14 : vector<1x128xf32> to vector<2x128xf32>
      %61 = arith.addf %59, %60 : vector<2x128xf32>
      %c2_i32_27 = arith.constant 2 : i32
      %62 = tpu.dynamic_rotate %58 by %c2_i32_27 dim 1 : vector<2x128xf32>, i32 -> vector<2x128xf32>
      %63 = arith.addf %62, %13 : vector<2x128xf32>
      %64 = arith.maximumf %61, %63 : vector<2x128xf32>
      %65 = arith.maximumf %58, %64 : vector<2x128xf32>
      %66 = arith.subf %58, %65 : vector<2x128xf32>
      %67 = math.exp %66 : vector<2x128xf32>
      %68 = arith.subf %61, %65 : vector<2x128xf32>
      %69 = math.exp %68 : vector<2x128xf32>
      %70 = arith.addf %67, %69 : vector<2x128xf32>
      %71 = arith.subf %63, %65 : vector<2x128xf32>
      %72 = math.exp %71 : vector<2x128xf32>
      %73 = arith.addf %70, %72 : vector<2x128xf32>
      %74 = math.log %73 : vector<2x128xf32>
      %75 = arith.addf %65, %74 : vector<2x128xf32>
      %76 = arith.addf %75, %57 : vector<2x128xf32>
      %c2_i32_28 = arith.constant 2 : i32
      %77 = vector.broadcast %c2_i32_28 : i32 to vector<2x128xi32>
      %78 = arith.cmpi slt, %16, %77 : vector<2x128xi32>
      %cst_29 = arith.constant -1.000000e+05 : f32
      %79 = vector.broadcast %cst_29 : f32 to vector<2x128xf32>
      %80 = arith.select %78, %57, %79 : vector<2x128xi1>, vector<2x128xf32>
      %c0_i32_30 = arith.constant 0 : i32
      %81 = arith.cmpi eq, %54, %c0_i32_30 : i32
      %82 = arith.select %81, %80, %76 : vector<2x128xf32>
      %c0_31 = arith.constant 0 : index
      %c0_32 = arith.constant 0 : index
      %83 = vector.load %arg7[%c0_31, %c0_32] : memref<2x128xf32, #tpu.memory_space<vmem>>, vector<2x128xf32>
      tpu.vector_store %arg7[%c0_31, %c0_32], %82 {strides = array<i32>} : memref<2x128xf32, #tpu.memory_space<vmem>>, vector<2x128xf32>,
      %c2_i32_33 = arith.constant 2 : i32
      %84 = arith.addi %0, %c2_i32_33 : i32
      %c0_34 = arith.constant 0 : index
      %85 = arith.index_cast %c2_i32_33 : i32 to index
      %c0_35 = arith.constant 0 : index
      %86 = vector.load %arg2[%c0_34, %85, %c0_35] : memref<2x8x128xf32, #tpu.memory_space<vmem>>, vector<2x1x128xf32>
      %87 = vector.shape_cast %86 : vector<2x1x128xf32> to vector<2x128xf32>
      %c0_36 = arith.constant 0 : index
      %c0_37 = arith.constant 0 : index
      %88 = vector.load %arg7[%c0_36, %c0_37] : memref<2x128xf32, #tpu.memory_space<vmem>>, vector<2x128xf32>
      %c1_i32_38 = arith.constant 1 : i32
      %89 = tpu.dynamic_rotate %88 by %c1_i32_38 dim 1 : vector<2x128xf32>, i32 -> vector<2x128xf32>
      %90 = vector.broadcast %14 : vector<1x128xf32> to vector<2x128xf32>
      %91 = arith.addf %89, %90 : vector<2x128xf32>
      %c2_i32_39 = arith.constant 2 : i32
      %92 = tpu.dynamic_rotate %88 by %c2_i32_39 dim 1 : vector<2x128xf32>, i32 -> vector<2x128xf32>
      %93 = arith.addf %92, %13 : vector<2x128xf32>
      %94 = arith.maximumf %91, %93 : vector<2x128xf32>
      %95 = arith.maximumf %88, %94 : vector<2x128xf32>
      %96 = arith.subf %88, %95 : vector<2x128xf32>
      %97 = math.exp %96 : vector<2x128xf32>
      %98 = arith.subf %91, %95 : vector<2x128xf32>
      %99 = math.exp %98 : vector<2x128xf32>
      %100 = arith.addf %97, %99 : vector<2x128xf32>
      %101 = arith.subf %93, %95 : vector<2x128xf32>
      %102 = math.exp %101 : vector<2x128xf32>
      %103 = arith.addf %100, %102 : vector<2x128xf32>
      %104 = math.log %103 : vector<2x128xf32>
      %105 = arith.addf %95, %104 : vector<2x128xf32>
      %106 = arith.addf %105, %87 : vector<2x128xf32>
      %c2_i32_40 = arith.constant 2 : i32
      %107 = vector.broadcast %c2_i32_40 : i32 to vector<2x128xi32>
      %108 = arith.cmpi slt, %16, %107 : vector<2x128xi32>
      %cst_41 = arith.constant -1.000000e+05 : f32
      %109 = vector.broadcast %cst_41 : f32 to vector<2x128xf32>
      %110 = arith.select %108, %87, %109 : vector<2x128xi1>, vector<2x128xf32>
      %c0_i32_42 = arith.constant 0 : i32
      %111 = arith.cmpi eq, %84, %c0_i32_42 : i32
      %112 = arith.select %111, %110, %106 : vector<2x128xf32>
      %c0_43 = arith.constant 0 : index
      %c0_44 = arith.constant 0 : index
      %113 = vector.load %arg7[%c0_43, %c0_44] : memref<2x128xf32, #tpu.memory_space<vmem>>, vector<2x128xf32>
      tpu.vector_store %arg7[%c0_43, %c0_44], %112 {strides = array<i32>} : memref<2x128xf32, #tpu.memory_space<vmem>>, vector<2x128xf32>,
      %c3_i32 = arith.constant 3 : i32
      %114 = arith.addi %0, %c3_i32 : i32
      %c0_45 = arith.constant 0 : index
      %115 = arith.index_cast %c3_i32 : i32 to index
      %c0_46 = arith.constant 0 : index
      %116 = vector.load %arg2[%c0_45, %115, %c0_46] : memref<2x8x128xf32, #tpu.memory_space<vmem>>, vector<2x1x128xf32>
      %117 = vector.shape_cast %116 : vector<2x1x128xf32> to vector<2x128xf32>
      %c0_47 = arith.constant 0 : index
      %c0_48 = arith.constant 0 : index
      %118 = vector.load %arg7[%c0_47, %c0_48] : memref<2x128xf32, #tpu.memory_space<vmem>>, vector<2x128xf32>
      %c1_i32_49 = arith.constant 1 : i32
      %119 = tpu.dynamic_rotate %118 by %c1_i32_49 dim 1 : vector<2x128xf32>, i32 -> vector<2x128xf32>
      %120 = vector.broadcast %14 : vector<1x128xf32> to vector<2x128xf32>
      %121 = arith.addf %119, %120 : vector<2x128xf32>
      %c2_i32_50 = arith.constant 2 : i32
      %122 = tpu.dynamic_rotate %118 by %c2_i32_50 dim 1 : vector<2x128xf32>, i32 -> vector<2x128xf32>
      %123 = arith.addf %122, %13 : vector<2x128xf32>
      %124 = arith.maximumf %121, %123 : vector<2x128xf32>
      %125 = arith.maximumf %118, %124 : vector<2x128xf32>
      %126 = arith.subf %118, %125 : vector<2x128xf32>
      %127 = math.exp %126 : vector<2x128xf32>
      %128 = arith.subf %121, %125 : vector<2x128xf32>
      %129 = math.exp %128 : vector<2x128xf32>
      %130 = arith.addf %127, %129 : vector<2x128xf32>
      %131 = arith.subf %123, %125 : vector<2x128xf32>
      %132 = math.exp %131 : vector<2x128xf32>
      %133 = arith.addf %130, %132 : vector<2x128xf32>
      %134 = math.log %133 : vector<2x128xf32>
      %135 = arith.addf %125, %134 : vector<2x128xf32>
      %136 = arith.addf %135, %117 : vector<2x128xf32>
      %c2_i32_51 = arith.constant 2 : i32
      %137 = vector.broadcast %c2_i32_51 : i32 to vector<2x128xi32>
      %138 = arith.cmpi slt, %16, %137 : vector<2x128xi32>
      %cst_52 = arith.constant -1.000000e+05 : f32
      %139 = vector.broadcast %cst_52 : f32 to vector<2x128xf32>
      %140 = arith.select %138, %117, %139 : vector<2x128xi1>, vector<2x128xf32>
      %c0_i32_53 = arith.constant 0 : i32
      %141 = arith.cmpi eq, %114, %c0_i32_53 : i32
      %142 = arith.select %141, %140, %136 : vector<2x128xf32>
      %c0_54 = arith.constant 0 : index
      %c0_55 = arith.constant 0 : index
      %143 = vector.load %arg7[%c0_54, %c0_55] : memref<2x128xf32, #tpu.memory_space<vmem>>, vector<2x128xf32>
      tpu.vector_store %arg7[%c0_54, %c0_55], %142 {strides = array<i32>} : memref<2x128xf32, #tpu.memory_space<vmem>>, vector<2x128xf32>,
      %c4_i32 = arith.constant 4 : i32
      %144 = arith.addi %0, %c4_i32 : i32
      %c0_56 = arith.constant 0 : index
      %145 = arith.index_cast %c4_i32 : i32 to index
      %c0_57 = arith.constant 0 : index
      %146 = vector.load %arg2[%c0_56, %145, %c0_57] : memref<2x8x128xf32, #tpu.memory_space<vmem>>, vector<2x1x128xf32>
      %147 = vector.shape_cast %146 : vector<2x1x128xf32> to vector<2x128xf32>
      %c0_58 = arith.constant 0 : index
      %c0_59 = arith.constant 0 : index
      %148 = vector.load %arg7[%c0_58, %c0_59] : memref<2x128xf32, #tpu.memory_space<vmem>>, vector<2x128xf32>
      %c1_i32_60 = arith.constant 1 : i32
      %149 = tpu.dynamic_rotate %148 by %c1_i32_60 dim 1 : vector<2x128xf32>, i32 -> vector<2x128xf32>
      %150 = vector.broadcast %14 : vector<1x128xf32> to vector<2x128xf32>
      %151 = arith.addf %149, %150 : vector<2x128xf32>
      %c2_i32_61 = arith.constant 2 : i32
      %152 = tpu.dynamic_rotate %148 by %c2_i32_61 dim 1 : vector<2x128xf32>, i32 -> vector<2x128xf32>
      %153 = arith.addf %152, %13 : vector<2x128xf32>
      %154 = arith.maximumf %151, %153 : vector<2x128xf32>
      %155 = arith.maximumf %148, %154 : vector<2x128xf32>
      %156 = arith.subf %148, %155 : vector<2x128xf32>
      %157 = math.exp %156 : vector<2x128xf32>
      %158 = arith.subf %151, %155 : vector<2x128xf32>
      %159 = math.exp %158 : vector<2x128xf32>
      %160 = arith.addf %157, %159 : vector<2x128xf32>
      %161 = arith.subf %153, %155 : vector<2x128xf32>
      %162 = math.exp %161 : vector<2x128xf32>
      %163 = arith.addf %160, %162 : vector<2x128xf32>
      %164 = math.log %163 : vector<2x128xf32>
      %165 = arith.addf %155, %164 : vector<2x128xf32>
      %166 = arith.addf %165, %147 : vector<2x128xf32>
      %c2_i32_62 = arith.constant 2 : i32
      %167 = vector.broadcast %c2_i32_62 : i32 to vector<2x128xi32>
      %168 = arith.cmpi slt, %16, %167 : vector<2x128xi32>
      %cst_63 = arith.constant -1.000000e+05 : f32
      %169 = vector.broadcast %cst_63 : f32 to vector<2x128xf32>
      %170 = arith.select %168, %147, %169 : vector<2x128xi1>, vector<2x128xf32>
      %c0_i32_64 = arith.constant 0 : i32
      %171 = arith.cmpi eq, %144, %c0_i32_64 : i32
      %172 = arith.select %171, %170, %166 : vector<2x128xf32>
      %c0_65 = arith.constant 0 : index
      %c0_66 = arith.constant 0 : index
      %173 = vector.load %arg7[%c0_65, %c0_66] : memref<2x128xf32, #tpu.memory_space<vmem>>, vector<2x128xf32>
      tpu.vector_store %arg7[%c0_65, %c0_66], %172 {strides = array<i32>} : memref<2x128xf32, #tpu.memory_space<vmem>>, vector<2x128xf32>,
      %c5_i32 = arith.constant 5 : i32
      %174 = arith.addi %0, %c5_i32 : i32
      %c0_67 = arith.constant 0 : index
      %175 = arith.index_cast %c5_i32 : i32 to index
      %c0_68 = arith.constant 0 : index
      %176 = vector.load %arg2[%c0_67, %175, %c0_68] : memref<2x8x128xf32, #tpu.memory_space<vmem>>, vector<2x1x128xf32>
      %177 = vector.shape_cast %176 : vector<2x1x128xf32> to vector<2x128xf32>
      %c0_69 = arith.constant 0 : index
      %c0_70 = arith.constant 0 : index
      %178 = vector.load %arg7[%c0_69, %c0_70] : memref<2x128xf32, #tpu.memory_space<vmem>>, vector<2x128xf32>
      %c1_i32_71 = arith.constant 1 : i32
      %179 = tpu.dynamic_rotate %178 by %c1_i32_71 dim 1 : vector<2x128xf32>, i32 -> vector<2x128xf32>
      %180 = vector.broadcast %14 : vector<1x128xf32> to vector<2x128xf32>
      %181 = arith.addf %179, %180 : vector<2x128xf32>
      %c2_i32_72 = arith.constant 2 : i32
      %182 = tpu.dynamic_rotate %178 by %c2_i32_72 dim 1 : vector<2x128xf32>, i32 -> vector<2x128xf32>
      %183 = arith.addf %182, %13 : vector<2x128xf32>
      %184 = arith.maximumf %181, %183 : vector<2x128xf32>
      %185 = arith.maximumf %178, %184 : vector<2x128xf32>
      %186 = arith.subf %178, %185 : vector<2x128xf32>
      %187 = math.exp %186 : vector<2x128xf32>
      %188 = arith.subf %181, %185 : vector<2x128xf32>
      %189 = math.exp %188 : vector<2x128xf32>
      %190 = arith.addf %187, %189 : vector<2x128xf32>
      %191 = arith.subf %183, %185 : vector<2x128xf32>
      %192 = math.exp %191 : vector<2x128xf32>
      %193 = arith.addf %190, %192 : vector<2x128xf32>
      %194 = math.log %193 : vector<2x128xf32>
      %195 = arith.addf %185, %194 : vector<2x128xf32>
      %196 = arith.addf %195, %177 : vector<2x128xf32>
      %c2_i32_73 = arith.constant 2 : i32
      %197 = vector.broadcast %c2_i32_73 : i32 to vector<2x128xi32>
      %198 = arith.cmpi slt, %16, %197 : vector<2x128xi32>
      %cst_74 = arith.constant -1.000000e+05 : f32
      %199 = vector.broadcast %cst_74 : f32 to vector<2x128xf32>
      %200 = arith.select %198, %177, %199 : vector<2x128xi1>, vector<2x128xf32>
      %c0_i32_75 = arith.constant 0 : i32
      %201 = arith.cmpi eq, %174, %c0_i32_75 : i32
      %202 = arith.select %201, %200, %196 : vector<2x128xf32>
      %c0_76 = arith.constant 0 : index
      %c0_77 = arith.constant 0 : index
      %203 = vector.load %arg7[%c0_76, %c0_77] : memref<2x128xf32, #tpu.memory_space<vmem>>, vector<2x128xf32>
      tpu.vector_store %arg7[%c0_76, %c0_77], %202 {strides = array<i32>} : memref<2x128xf32, #tpu.memory_space<vmem>>, vector<2x128xf32>,
      %c6_i32 = arith.constant 6 : i32
      %204 = arith.addi %0, %c6_i32 : i32
      %c0_78 = arith.constant 0 : index
      %205 = arith.index_cast %c6_i32 : i32 to index
      %c0_79 = arith.constant 0 : index
      %206 = vector.load %arg2[%c0_78, %205, %c0_79] : memref<2x8x128xf32, #tpu.memory_space<vmem>>, vector<2x1x128xf32>
      %207 = vector.shape_cast %206 : vector<2x1x128xf32> to vector<2x128xf32>
      %c0_80 = arith.constant 0 : index
      %c0_81 = arith.constant 0 : index
      %208 = vector.load %arg7[%c0_80, %c0_81] : memref<2x128xf32, #tpu.memory_space<vmem>>, vector<2x128xf32>
      %c1_i32_82 = arith.constant 1 : i32
      %209 = tpu.dynamic_rotate %208 by %c1_i32_82 dim 1 : vector<2x128xf32>, i32 -> vector<2x128xf32>
      %210 = vector.broadcast %14 : vector<1x128xf32> to vector<2x128xf32>
      %211 = arith.addf %209, %210 : vector<2x128xf32>
      %c2_i32_83 = arith.constant 2 : i32
      %212 = tpu.dynamic_rotate %208 by %c2_i32_83 dim 1 : vector<2x128xf32>, i32 -> vector<2x128xf32>
      %213 = arith.addf %212, %13 : vector<2x128xf32>
      %214 = arith.maximumf %211, %213 : vector<2x128xf32>
      %215 = arith.maximumf %208, %214 : vector<2x128xf32>
      %216 = arith.subf %208, %215 : vector<2x128xf32>
      %217 = math.exp %216 : vector<2x128xf32>
      %218 = arith.subf %211, %215 : vector<2x128xf32>
      %219 = math.exp %218 : vector<2x128xf32>
      %220 = arith.addf %217, %219 : vector<2x128xf32>
      %221 = arith.subf %213, %215 : vector<2x128xf32>
      %222 = math.exp %221 : vector<2x128xf32>
      %223 = arith.addf %220, %222 : vector<2x128xf32>
      %224 = math.log %223 : vector<2x128xf32>
      %225 = arith.addf %215, %224 : vector<2x128xf32>
      %226 = arith.addf %225, %207 : vector<2x128xf32>
      %c2_i32_84 = arith.constant 2 : i32
      %227 = vector.broadcast %c2_i32_84 : i32 to vector<2x128xi32>
      %228 = arith.cmpi slt, %16, %227 : vector<2x128xi32>
      %cst_85 = arith.constant -1.000000e+05 : f32
      %229 = vector.broadcast %cst_85 : f32 to vector<2x128xf32>
      %230 = arith.select %228, %207, %229 : vector<2x128xi1>, vector<2x128xf32>
      %c0_i32_86 = arith.constant 0 : i32
      %231 = arith.cmpi eq, %204, %c0_i32_86 : i32
      %232 = arith.select %231, %230, %226 : vector<2x128xf32>
      %c0_87 = arith.constant 0 : index
      %c0_88 = arith.constant 0 : index
      %233 = vector.load %arg7[%c0_87, %c0_88] : memref<2x128xf32, #tpu.memory_space<vmem>>, vector<2x128xf32>
      tpu.vector_store %arg7[%c0_87, %c0_88], %232 {strides = array<i32>} : memref<2x128xf32, #tpu.memory_space<vmem>>, vector<2x128xf32>,
      %c7_i32 = arith.constant 7 : i32
      %234 = arith.addi %0, %c7_i32 : i32
      %c0_89 = arith.constant 0 : index
      %235 = arith.index_cast %c7_i32 : i32 to index
      %c0_90 = arith.constant 0 : index
      %236 = vector.load %arg2[%c0_89, %235, %c0_90] : memref<2x8x128xf32, #tpu.memory_space<vmem>>, vector<2x1x128xf32>
      %237 = vector.shape_cast %236 : vector<2x1x128xf32> to vector<2x128xf32>
      %c0_91 = arith.constant 0 : index
      %c0_92 = arith.constant 0 : index
      %238 = vector.load %arg7[%c0_91, %c0_92] : memref<2x128xf32, #tpu.memory_space<vmem>>, vector<2x128xf32>
      %c1_i32_93 = arith.constant 1 : i32
      %239 = tpu.dynamic_rotate %238 by %c1_i32_93 dim 1 : vector<2x128xf32>, i32 -> vector<2x128xf32>
      %240 = vector.broadcast %14 : vector<1x128xf32> to vector<2x128xf32>
      %241 = arith.addf %239, %240 : vector<2x128xf32>
      %c2_i32_94 = arith.constant 2 : i32
      %242 = tpu.dynamic_rotate %238 by %c2_i32_94 dim 1 : vector<2x128xf32>, i32 -> vector<2x128xf32>
      %243 = arith.addf %242, %13 : vector<2x128xf32>
      %244 = arith.maximumf %241, %243 : vector<2x128xf32>
      %245 = arith.maximumf %238, %244 : vector<2x128xf32>
      %246 = arith.subf %238, %245 : vector<2x128xf32>
      %247 = math.exp %246 : vector<2x128xf32>
      %248 = arith.subf %241, %245 : vector<2x128xf32>
      %249 = math.exp %248 : vector<2x128xf32>
      %250 = arith.addf %247, %249 : vector<2x128xf32>
      %251 = arith.subf %243, %245 : vector<2x128xf32>
      %252 = math.exp %251 : vector<2x128xf32>
      %253 = arith.addf %250, %252 : vector<2x128xf32>
      %254 = math.log %253 : vector<2x128xf32>
      %255 = arith.addf %245, %254 : vector<2x128xf32>
      %256 = arith.addf %255, %237 : vector<2x128xf32>
      %c2_i32_95 = arith.constant 2 : i32
      %257 = vector.broadcast %c2_i32_95 : i32 to vector<2x128xi32>
      %258 = arith.cmpi slt, %16, %257 : vector<2x128xi32>
      %cst_96 = arith.constant -1.000000e+05 : f32
      %259 = vector.broadcast %cst_96 : f32 to vector<2x128xf32>
      %260 = arith.select %258, %237, %259 : vector<2x128xi1>, vector<2x128xf32>
      %c0_i32_97 = arith.constant 0 : i32
      %261 = arith.cmpi eq, %234, %c0_i32_97 : i32
      %262 = arith.select %261, %260, %256 : vector<2x128xf32>
      %c0_98 = arith.constant 0 : index
      %c0_99 = arith.constant 0 : index
      %263 = vector.load %arg7[%c0_98, %c0_99] : memref<2x128xf32, #tpu.memory_space<vmem>>, vector<2x128xf32>
      tpu.vector_store %arg7[%c0_98, %c0_99], %262 {strides = array<i32>} : memref<2x128xf32, #tpu.memory_space<vmem>>, vector<2x128xf32>,
      %c8_i32_100 = arith.constant 8 : i32
    } else {
    }
    return
  }
  func.func @transform_0(%arg0: i32, %arg1: memref<2xi32, #tpu.memory_space<smem>>) -> (i32, i32, i32) {
    %c0_i32 = arith.constant 0 : i32
    %c0_i32_0 = arith.constant 0 : i32
    %c0_i32_1 = arith.constant 0 : i32
    return %c0_i32, %arg0, %c0_i32_0 : i32, i32, i32
  }
  func.func @transform_1(%arg0: i32, %arg1: memref<2xi32, #tpu.memory_space<smem>>) -> (i32, i32) {
    %c0_i32 = arith.constant 0 : i32
    %c0_i32_0 = arith.constant 0 : i32
    %c0_i32_1 = arith.constant 0 : i32
    return %c0_i32, %c0_i32_0 : i32, i32
  }
  func.func @transform_2(%arg0: i32, %arg1: memref<2xi32, #tpu.memory_space<smem>>) -> (i32, i32) {
    %c0_i32 = arith.constant 0 : i32
    %c0_i32_0 = arith.constant 0 : i32
    %c0_i32_1 = arith.constant 0 : i32
    return %c0_i32, %c0_i32_0 : i32, i32
  }
  func.func @transform_3(%arg0: i32, %arg1: memref<2xi32, #tpu.memory_space<smem>>) -> (i32, i32) {
    %c0_i32 = arith.constant 0 : i32
    %c0_i32_0 = arith.constant 0 : i32
    %c0_i32_1 = arith.constant 0 : i32
    return %c0_i32, %c0_i32_0 : i32, i32
  }
  func.func @transform_4(%arg0: i32, %arg1: memref<2xi32, #tpu.memory_space<smem>>) -> (i32, i32) {
    %c0_i32 = arith.constant 0 : i32
    %c0_i32_0 = arith.constant 0 : i32
    %c0_i32_1 = arith.constant 0 : i32
    return %c0_i32, %c0_i32_0 : i32, i32
  }
}

</mosaic_0001>

<llo_original>
// kernel: speech_encoder_ctc_forward.2
$region0: #{speech_encoder_ctc_forward.2}
  #allocation0 [shape = 'u32[]', space=smem, size = 0x4, offset = 0x4, fixed_abs, tag = 'smem constant byte address 0x4 - core index']
  #allocation1 [shape = 'u32[144,128]{1,0:T(1,128)}', space=vmem, size = 0x12000, scoped, tag = 'internal scratch']
  %s0 = inlined_call_operand.vmem [shape: f32[2,8,16], index: 0, kind: input, shape index: {}]
  %s1 = inlined_call_operand.vmem [shape: f32[16,128], index: 1, kind: input, shape index: {}]
  %s2 = inlined_call_operand.vmem [shape: f32[1,128], index: 2, kind: input, shape index: {}]
  %s3 = inlined_call_operand.vmem [shape: f32[128,128], index: 3, kind: input, shape index: {}]
  %s4 = inlined_call_operand.vmem [shape: f32[1,128], index: 4, kind: input, shape index: {}]
  %s5 = inlined_call_operand.vmem [shape: s32[2,1,128], index: 5, kind: input, shape index: {}]
  %s6 = inlined_call_operand.hbm [shape: f32[2,8,128], index: 6, kind: output, shape index: {0}]
  %s7 = inlined_call_operand.vmem [shape: f32[2,8,128], index: 7, kind: output, shape index: {1}]
  %8 = xla_tuple %s6, %s7
  %s9 = sld [smem:[#allocation0]]
  $region65: #{speech_encoder_ctc_forward.2} parent=0
    _
  %s11 = ssub.s32 1, %s9
  %s12 = scalar_select 0, %s11, %s9
  $region1: #{speech_encoder_ctc_forward.2} parent=0
    #allocation2 [shape = 'u8[8192]{0}', space=vmem, size = 0x2000, scoped, tag = 'output window, operand 0']
    #allocation3 [shape = 's32[2]{0}', space=sflag, size = 0x8, scoped, tag = 'scoped memory for speech_encoder_ctc_forward.2']
    %13 = vsyncpa [#allocation3], 0
    %s14 = scalar_lea.sflag [#allocation3], 1
    %15 = vsyncpa %s14, 0
    loop: start=0, step=1, limit=4
    $region2: #{speech_encoder_ctc_forward.2} parent=1 // loop_pre_header
      _
    $region3: #{speech_encoder_ctc_forward.2} parent=1 // loop_header
      %s17 = sphi 0, %s21
      %p18 = scmp.ge.s32.totalorder %s17, 4
      %s24 = sphi 0, %s36
      %s25 = sphi 0, %s32
      %s26 = sphi 0, %s24
      %s27 = sphi 0, %s25
      %s28 = sphi 0, %s26
      %s29 = sphi 0, %s27
      %s41 = sphi 0, %s43
      %s44 = sphi 0, %s41
      %s45 = sphi 0, %s44
      %s61 = sphi 0, %s45
      %s65 = sphi 0, %s65
      %s67 = sphi 0, %s65
      %s68 = sphi 0, %s67
      %s82 = sphi 0, %s68
      %s86 = sphi 0, %s86
      %s88 = sphi 0, %s86
      %s89 = sphi 0, %s88
      %s103 = sphi 0, %s89
      %s107 = sphi 0, %s107
      %s109 = sphi 0, %s107
      %s110 = sphi 0, %s109
      %s124 = sphi 0, %s110
      %s128 = sphi 0, %s128
      %s130 = sphi 0, %s128
      %s131 = sphi 0, %s130
      %s145 = sphi 0, %s131
      %s151 = sphi 0, %s153
      %s154 = sphi 0, %s151
      %s155 = sphi 0, %s154
      %s171 = sphi 0, %s155
      %s179 = sphi 0, %s181
      %s182 = sphi 0, %s179
      %s183 = sphi 0, %s182
      %s199 = sphi 0, %s183
      %s207 = sphi 0, %s209
      %s210 = sphi 0, %s207
      %s211 = sphi 0, %s210
      %s227 = sphi 0, %s211
    $region4: #{speech_encoder_ctc_forward.2} parent=1 // loop_header_branch
      %20 = sbr.rel (%p18) target = $region8
    $region5: #{speech_encoder_ctc_forward.2} parent=1 // loop_body
      %s22 = ssub.s32 %s17, 1
      %s23 = ssub.s32 %s17, 2
      %s30 = sadd.s32 1, %s25
      %p31 = scmp.ge.s32.totalorder %s30, 1
      %s32 = scalar_select %p31, 0, %s30
      %s33 = sadd.s32 1, %s24
      %s34 = scalar_select %p31, %s33, %s24
      %p35 = scmp.ge.s32.totalorder %s34, 2
      %s36 = scalar_select %p35, 0, %s34
      %s37 = ssub.s32 %s24, %s36
      %s38 = ssub.s32 %s25, %s32
      %s39 = sor.u32 %s37, %s38
      %p40 = scmp.eq.s32.totalorder %s39, 0
      %s42 = sadd.s32 %s41, 1
      %s43 = scalar_select %p40, %s41, %s42
      %p46 = pneg %p40
      %p47 = scmp.eq.s32.totalorder %s17, 1
      %p48 = por %p46, %p47
      %p49 = scmp.ne.s32.totalorder %s41, %s44
      %p50 = scmp.eq.s32.totalorder %s17, 0
      %p51 = por %p49, %p50
      %p52 = scmp.ne.s32.totalorder %s41, %s44
      %p53 = scmp.eq.s32.totalorder %s22, 1
      %p54 = por %p52, %p53
      %p55 = scmp.ne.s32.totalorder %s44, %s45
      %p56 = scmp.eq.s32.totalorder %s22, 0
      %p57 = por %p55, %p56
      %p58 = scmp.ne.s32.totalorder %s44, %s45
      %p59 = scmp.eq.s32.totalorder %s23, 1
      %p60 = por %p58, %p59
      %p62 = scmp.ne.s32.totalorder %s45, %s61
      %p63 = scmp.eq.s32.totalorder %s23, 0
      %p64 = por %p62, %p63
      %s66 = sadd.s32 %s65, 1
      %p69 = scmp.eq.s32.totalorder %s17, 1
      %p70 = scmp.ne.s32.totalorder %s65, %s67
      %p71 = scmp.eq.s32.totalorder %s17, 0
      %p72 = por %p70, %p71
      %p73 = scmp.ne.s32.totalorder %s65, %s67
      %p74 = scmp.eq.s32.totalorder %s22, 1
      %p75 = por %p73, %p74
      %p76 = scmp.ne.s32.totalorder %s67, %s68
      %p77 = scmp.eq.s32.totalorder %s22, 0
      %p78 = por %p76, %p77
      %p79 = scmp.ne.s32.totalorder %s67, %s68
      %p80 = scmp.eq.s32.totalorder %s23, 1
      %p81 = por %p79, %p80
      %p83 = scmp.ne.s32.totalorder %s68, %s82
      %p84 = scmp.eq.s32.totalorder %s23, 0
      %p85 = por %p83, %p84
      %s87 = sadd.s32 %s86, 1
      %p90 = scmp.eq.s32.totalorder %s17, 1
      %p91 = scmp.ne.s32.totalorder %s86, %s88
      %p92 = scmp.eq.s32.totalorder %s17, 0
      %p93 = por %p91, %p92
      %p94 = scmp.ne.s32.totalorder %s86, %s88
      %p95 = scmp.eq.s32.totalorder %s22, 1
      %p96 = por %p94, %p95
      %p97 = scmp.ne.s32.totalorder %s88, %s89
      %p98 = scmp.eq.s32.totalorder %s22, 0
      %p99 = por %p97, %p98
      %p100 = scmp.ne.s32.totalorder %s88, %s89
      %p101 = scmp.eq.s32.totalorder %s23, 1
      %p102 = por %p100, %p101
      %p104 = scmp.ne.s32.totalorder %s89, %s103
      %p105 = scmp.eq.s32.totalorder %s23, 0
      %p106 = por %p104, %p105
      %s108 = sadd.s32 %s107, 1
      %p111 = scmp.eq.s32.totalorder %s17, 1
      %p112 = scmp.ne.s32.totalorder %s107, %s109
      %p113 = scmp.eq.s32.totalorder %s17, 0
      %p114 = por %p112, %p113
      %p115 = scmp.ne.s32.totalorder %s107, %s109
      %p116 = scmp.eq.s32.totalorder %s22, 1
      %p117 = por %p115, %p116
      %p118 = scmp.ne.s32.totalorder %s109, %s110
      %p119 = scmp.eq.s32.totalorder %s22, 0
      %p120 = por %p118, %p119
      %p121 = scmp.ne.s32.totalorder %s109, %s110
      %p122 = scmp.eq.s32.totalorder %s23, 1
      %p123 = por %p121, %p122
      %p125 = scmp.ne.s32.totalorder %s110, %s124
      %p126 = scmp.eq.s32.totalorder %s23, 0
      %p127 = por %p125, %p126
      %s129 = sadd.s32 %s128, 1
      %p132 = scmp.eq.s32.totalorder %s17, 1
      %p133 = scmp.ne.s32.totalorder %s128, %s130
      %p134 = scmp.eq.s32.totalorder %s17, 0
      %p135 = por %p133, %p134
      %p136 = scmp.ne.s32.totalorder %s128, %s130
      %p137 = scmp.eq.s32.totalorder %s22, 1
      %p138 = por %p136, %p137
      %p139 = scmp.ne.s32.totalorder %s130, %s131
      %p140 = scmp.eq.s32.totalorder %s22, 0
      %p141 = por %p139, %p140
      %p142 = scmp.ne.s32.totalorder %s130, %s131
      %p143 = scmp.eq.s32.totalorder %s23, 1
      %p144 = por %p142, %p143
      %p146 = scmp.ne.s32.totalorder %s131, %s145
      %p147 = scmp.eq.s32.totalorder %s23, 0
      %p148 = por %p146, %p147
      %s149 = ssub.s32 %s24, %s36
      %p150 = scmp.eq.s32.totalorder %s149, 0
      %s152 = sadd.s32 %s151, 1
      %s153 = scalar_select %p150, %s151, %s152
      %p156 = pneg %p150
      %p157 = scmp.eq.s32.totalorder %s17, 1
      %p158 = por %p156, %p157
      %p159 = scmp.ne.s32.totalorder %s151, %s154
      %p160 = scmp.eq.s32.totalorder %s17, 0
      %p161 = por %p159, %p160
      %p162 = scmp.ne.s32.totalorder %s151, %s154
      %p163 = scmp.eq.s32.totalorder %s22, 1
      %p164 = por %p162, %p163
      %p165 = scmp.ne.s32.totalorder %s154, %s155
      %p166 = scmp.eq.s32.totalorder %s22, 0
      %p167 = por %p165, %p166
      %p168 = scmp.ne.s32.totalorder %s154, %s155
      %p169 = scmp.eq.s32.totalorder %s23, 1
      %p170 = por %p168, %p169
      %p172 = scmp.ne.s32.totalorder %s155, %s171
      %p173 = scmp.eq.s32.totalorder %s23, 0
      %p174 = por %p172, %p173
      %s175 = ssub.s32 %s24, %s36
      %s176 = ssub.s32 %s25, %s32
      %s177 = sor.u32 %s175, %s176
      %p178 = scmp.eq.s32.totalorder %s177, 0
      %s180 = sadd.s32 %s179, 1
      %s181 = scalar_select %p178, %s179, %s180
      %p184 = pneg %p178
      %p185 = scmp.eq.s32.totalorder %s17, 1
      %p186 = por %p184, %p185
      %p187 = scmp.ne.s32.totalorder %s179, %s182
      %p188 = scmp.eq.s32.totalorder %s17, 0
      %p189 = por %p187, %p188
      %p190 = scmp.ne.s32.totalorder %s179, %s182
      %p191 = scmp.eq.s32.totalorder %s22, 1
      %p192 = por %p190, %p191
      %p193 = scmp.ne.s32.totalorder %s182, %s183
      %p194 = scmp.eq.s32.totalorder %s22, 0
      %p195 = por %p193, %p194
      %p196 = scmp.ne.s32.totalorder %s182, %s183
      %p197 = scmp.eq.s32.totalorder %s23, 1
      %p198 = por %p196, %p197
      %p200 = scmp.ne.s32.totalorder %s183, %s199
      %p201 = scmp.eq.s32.totalorder %s23, 0
      %p202 = por %p200, %p201
      %s203 = ssub.s32 %s24, %s36
      %s204 = ssub.s32 %s25, %s32
      %s205 = sor.u32 %s203, %s204
      %p206 = scmp.eq.s32.totalorder %s205, 0
      %s208 = sadd.s32 %s207, 1
      %s209 = scalar_select %p206, %s207, %s208
      %p212 = pneg %p206
      %p213 = scmp.eq.s32.totalorder %s17, 1
      %p214 = por %p212, %p213
      %p215 = scmp.ne.s32.totalorder %s207, %s210
      %p216 = scmp.eq.s32.totalorder %s17, 0
      %p217 = por %p215, %p216
      %p218 = scmp.ne.s32.totalorder %s207, %s210
      %p219 = scmp.eq.s32.totalorder %s22, 1
      %p220 = por %p218, %p219
      %p221 = scmp.ne.s32.totalorder %s210, %s211
      %p222 = scmp.eq.s32.totalorder %s22, 0
      %p223 = por %p221, %p222
      %p224 = scmp.ne.s32.totalorder %s210, %s211
      %p225 = scmp.eq.s32.totalorder %s23, 1
      %p226 = por %p224, %p225
      %p228 = scmp.ne.s32.totalorder %s211, %s227
      %p229 = scmp.eq.s32.totalorder %s23, 0
      %p230 = por %p228, %p229
      %p231 = scmp.le.s32.totalorder 1, %s17
      %p232 = scmp.lt.s32.totalorder %s17, 3
      %p233 = pnand %p231, %p232
      %p234 = pneg %p233
      // Predicated region
      $region9: #{speech_encoder_ctc_forward.2} parent=5 // pred_check
        _
      $region10: #{speech_encoder_ctc_forward.2} parent=5 // pred_check_branch
        %236 = sbr.rel (%p233) target = $region12
      $region11: #{speech_encoder_ctc_forward.2} parent=5 // pred_region
        %s237 = ssub.s32 %s17, 1
        // Predicated region
        $region13: #{speech_encoder_ctc_forward.2} parent=11 // pred_check
          %p238 = pneg %p78
        $region14: #{speech_encoder_ctc_forward.2} parent=11 // pred_check_branch
          %240 = sbr.rel (%p238) target = $region16
        $region15: #{speech_encoder_ctc_forward.2} parent=11 // pred_region
          _
        $region16: #{speech_encoder_ctc_forward.2} parent=11 // pred_fallthru
          _
        // Predicated region
        $region17: #{speech_encoder_ctc_forward.2} parent=11 // pred_check
          %p241 = pneg %p99
        $region18: #{speech_encoder_ctc_forward.2} parent=11 // pred_check_branch
          %243 = sbr.rel (%p241) target = $region20
        $region19: #{speech_encoder_ctc_forward.2} parent=11 // pred_region
          _
        $region20: #{speech_encoder_ctc_forward.2} parent=11 // pred_fallthru
          _
        // Predicated region
        $region21: #{speech_encoder_ctc_forward.2} parent=11 // pred_check
          %p244 = pneg %p120
        $region22: #{speech_encoder_ctc_forward.2} parent=11 // pred_check_branch
          %246 = sbr.rel (%p244) target = $region24
        $region23: #{speech_encoder_ctc_forward.2} parent=11 // pred_region
          _
        $region24: #{speech_encoder_ctc_forward.2} parent=11 // pred_fallthru
          _
        // Predicated region
        $region25: #{speech_encoder_ctc_forward.2} parent=11 // pred_check
          %p247 = pneg %p141
        $region26: #{speech_encoder_ctc_forward.2} parent=11 // pred_check_branch
          %249 = sbr.rel (%p247) target = $region28
        $region27: #{speech_encoder_ctc_forward.2} parent=11 // pred_region
          _
        $region28: #{speech_encoder_ctc_forward.2} parent=11 // pred_fallthru
          _
      $region12: #{speech_encoder_ctc_forward.2} parent=5 // pred_fallthru
        _
      %p250 = scmp.lt.s32.totalorder %s17, 2
      // Predicated region
      $region29: #{speech_encoder_ctc_forward.2} parent=5 // pred_check
        %p251 = pneg %p250
      $region30: #{speech_encoder_ctc_forward.2} parent=5 // pred_check_branch
        %253 = sbr.rel (%p251) target = $region32
      $region31: #{speech_encoder_ctc_forward.2} parent=5 // pred_region
        // Predicated region
        $region33: #{speech_encoder_ctc_forward.2} parent=31 // pred_check
          %p254 = pneg %p51
        $region34: #{speech_encoder_ctc_forward.2} parent=31 // pred_check_branch
          %256 = sbr.rel (%p254) target = $region36
        $region35: #{speech_encoder_ctc_forward.2} parent=31 // pred_region
          %p257 = scmp.lt.s32.totalorder %s24, 1
          %s258 = scalar_select %p257, %s24, 1
          %p259 = scmp.lt.s32.totalorder %s25, 0
          %s260 = scalar_select %p259, %s25, 0
          %s261 = sadd.s32 %s260, %s258
          %s262 = smul.addr %s261, 8
          %s263 = scalar_lea.vmem %s0, %s262
        $region36: #{speech_encoder_ctc_forward.2} parent=31 // pred_fallthru
          _
        // Predicated region
        $region37: #{speech_encoder_ctc_forward.2} parent=31 // pred_check
          %p264 = pneg %p161
        $region38: #{speech_encoder_ctc_forward.2} parent=31 // pred_check_branch
          %266 = sbr.rel (%p264) target = $region40
        $region39: #{speech_encoder_ctc_forward.2} parent=31 // pred_region
          %p267 = scmp.lt.s32.totalorder %s24, 1
          %s268 = scalar_select %p267, %s24, 1
          %s269 = scalar_lea.vmem %s5, %s268
        $region40: #{speech_encoder_ctc_forward.2} parent=31 // pred_fallthru
          _
      $region32: #{speech_encoder_ctc_forward.2} parent=5 // pred_fallthru
        _
      %p270 = scmp.le.s32.totalorder 1, %s17
      %p271 = scmp.lt.s32.totalorder %s17, 3
      %p272 = pnand %p270, %p271
      %p273 = pneg %p272
      // Predicated region
      $region41: #{speech_encoder_ctc_forward.2} parent=5 // pred_check
        _
      $region42: #{speech_encoder_ctc_forward.2} parent=5 // pred_check_branch
        %275 = sbr.rel (%p272) target = $region44
      $region43: #{speech_encoder_ctc_forward.2} parent=5 // pred_region
        %s276 = ssub.s32 %s17, 1
        %p277 = scmp.lt.s32.totalorder %s26, 1
        %s278 = scalar_select %p277, %s26, 1
        %p279 = scmp.lt.s32.totalorder %s27, 0
        %s280 = scalar_select %p279, %s27, 0
        %s281 = sadd.s32 %s280, %s278
        %s282 = smul.addr %s281, 8
        %s283 = scalar_lea.vmem %s0, %s282
        %p284 = pneg %p57
        %p285 = pneg %p54
        %p286 = pneg %p78
        %p287 = pneg %p75
        %p288 = pneg %p99
        %p289 = pneg %p96
        %p290 = pneg %p120
        %p291 = pneg %p117
        %p292 = pneg %p141
        %p293 = pneg %p138
        %p294 = scmp.lt.s32.totalorder %s26, 1
        %s295 = scalar_select %p294, %s26, 1
        %s296 = scalar_lea.vmem %s5, %s295
        %p297 = pneg %p167
        %p298 = pneg %p164
        %p299 = pneg %p195
        %p300 = pneg %p192
        %s301 = sand.u32 %s182, 1
        %s302 = scalar_lea.sflag [#allocation3], %s301
        %s303 = sand.u32 %s182, 1
        %s304 = smul.addr %s303, 8
        %s305 = scalar_lea.vmem [#allocation2], %s304
        %p306 = pneg %p223
        %p307 = pneg %p220
        %p308 = scmp.lt.s32.totalorder %s26, 1
        %s309 = scalar_select %p308, %s26, 1
        %p310 = scmp.lt.s32.totalorder %s27, 0
        %s311 = scalar_select %p310, %s27, 0
        %s312 = sadd.s32 %s311, %s309
        %s313 = smul.addr %s312, 8
        %s314 = scalar_lea.vmem %s7, %s313
        %p315 = scmp.lt.s32.totalorder %s26, 1
        %s316 = scalar_select %p315, %s26, 1
        %p317 = scmp.lt.s32.totalorder %s27, 0
        %s318 = scalar_select %p317, %s27, 0
        %s319 = sadd.s32 %s318, %s316
        %s320 = smul.addr %s319, 8
        %s321 = scalar_lea.vmem %s0, %s320
        %p322 = scmp.lt.s32.totalorder %s26, 1
        %s323 = scalar_select %p322, %s26, 1
        %s324 = scalar_lea.vmem %s5, %s323
        %p325 = scmp.lt.s32.totalorder %s26, 1
        %s326 = scalar_select %p325, %s26, 1
        %p327 = scmp.lt.s32.totalorder %s27, 0
        %s328 = scalar_select %p327, %s27, 0
        %s329 = sadd.s32 %s328, %s326
        %s330 = smul.addr %s329, 8
        %s331 = scalar_lea.vmem %s7, %s330
        %v332 = vld [vmem:[%s321] sm:$0xff]
        %v333 = vld [vmem:[%s1] sm:$0xff]
        %v334 = vld [vmem:[%s1 + $0x8] sm:$0xff]
        %v335 = vld [vmem:[%s2] sm:$0x1]
        %v337 = vlaneseq
        %v338 = vshrl.u32 %v337, 7
        %v339 = vsub.s32 0, %v338
        %v340 = vrot.slane %v335, %v339
        %vm342 = vcmask 130048
        %v344 = vsel %vm342, %v332, 0
        %346 = vmatprep.subr.mxu0 0.0
        %347 = vmatpush1.msra.mxu0 0.0
        %348 = vmatprep.subr.mxu0 0.0
        %349 = vmatpush1.msra.mxu0 0.0
        %350 = vmatprep.subr.mxu0 0.0
        %351 = vmatpush1.msra.mxu0 0.0
        %352 = vmatprep.subr.mxu0 0.0
        %353 = vmatpush1.msra.mxu0 0.0
        %354 = vmatprep.subr.mxu0 0.0
        %355 = vmatpush1.msra.mxu0 0.0
        %356 = vmatprep.subr.mxu0 0.0
        %357 = vmatpush1.msra.mxu0 0.0
        %358 = vmatprep.subr.mxu0 0.0
        %359 = vmatpush1.msra.mxu0 0.0
        %360 = vmatprep.subr.mxu0 0.0
        %361 = vmatpush1.msra.mxu0 0.0
        %362 = vmatprep.subr.mxu0 0.0
        %363 = vmatpush1.msra.mxu0 0.0
        %364 = vmatprep.subr.mxu0 0.0
        %365 = vmatpush1.msra.mxu0 0.0
        %366 = vmatprep.subr.mxu0 0.0
        %367 = vmatpush1.msra.mxu0 0.0
        %368 = vmatprep.subr.mxu0 0.0
        %369 = vmatpush1.msra.mxu0 0.0
        %370 = vmatprep.subr.mxu0 0.0
        %371 = vmatpush1.msra.mxu0 0.0
        %372 = vmatprep.subr.mxu0 0.0
        %373 = vmatpush1.msra.mxu0 0.0
        %374 = vmatprep.subr.mxu0 0.0
        %375 = vmatpush1.msra.mxu0 %v334
        %376 = vmatprep.subr.mxu0 0.0
        %377 = vmatpush1.msra.mxu0 %v333
        %378 = vmatprep.subr.mxu0 0.0
        %379 = vmatpush2.msra.mxu0 0.0
        %380 = vmatprep.subr.mxu0 0.0
        %381 = vmatpush2.msra.mxu0 0.0
        %382 = vmatprep.subr.mxu0 0.0
        %383 = vmatpush2.msra.mxu0 0.0
        %384 = vmatprep.subr.mxu0 0.0
        %385 = vmatpush2.msra.mxu0 0.0
        %386 = vmatprep.subr.mxu0 0.0
        %387 = vmatpush2.msra.mxu0 0.0
        %388 = vmatprep.subr.mxu0 0.0
        %389 = vmatpush2.msra.mxu0 0.0
        %390 = vmatprep.subr.mxu0 0.0
        %391 = vmatpush2.msra.mxu0 0.0
        %392 = vmatprep.subr.mxu0 0.0
        %393 = vmatpush2.msra.mxu0 0.0
        %394 = vmatprep.subr.mxu0 0.0
        %395 = vmatpush2.msra.mxu0 0.0
        %396 = vmatprep.subr.mxu0 0.0
        %397 = vmatpush2.msra.mxu0 0.0
        %398 = vmatprep.subr.mxu0 0.0
        %399 = vmatpush2.msra.mxu0 0.0
        %400 = vmatprep.subr.mxu0 0.0
        %401 = vmatpush2.msra.mxu0 0.0
        %402 = vmatprep.subr.mxu0 0.0
        %403 = vmatpush2.msra.mxu0 0.0
        %404 = vmatprep.subr.mxu0 0.0
        %405 = vmatpush2.msra.mxu0 0.0
        %406 = vmatprep.subr.mxu0 0.0
        %407 = vmatpush2.msra.mxu0 0.0
        %408 = vmatprep.subr.mxu0 0.0
        %409 = vmatpush2.msra.mxu0 0.0
        %410 = vmatprep.mubr.f32.mxu0 0.0
        %411 = vmatmul.mubr.f32.gmra.mxu0 %v344
        %v412 = vpop.f32.mrf.mxu0
        %v413 = vadd.f32 %v340, %v412
        %v414 = vpop.f32.mrf.mxu0
        %415 = vdwg.mxu0
        %v416 = vmax.f32 %v413, 0.0
        %v417 = vld [vmem:[%s3] sm:$0xff]
        %v418 = vld [vmem:[%s3 + $0x8] sm:$0xff]
        %v419 = vld [vmem:[%s3 + $0x10] sm:$0xff]
        %v420 = vld [vmem:[%s3 + $0x18] sm:$0xff]
        %v421 = vld [vmem:[%s3 + $0x20] sm:$0xff]
        %v422 = vld [vmem:[%s3 + $0x28] sm:$0xff]
        %v423 = vld [vmem:[%s3 + $0x30] sm:$0xff]
        %v424 = vld [vmem:[%s3 + $0x38] sm:$0xff]
        %v425 = vld [vmem:[%s3 + $0x40] sm:$0xff]
        %v426 = vld [vmem:[%s3 + $0x48] sm:$0xff]
        %v427 = vld [vmem:[%s3 + $0x50] sm:$0xff]
        %v428 = vld [vmem:[%s3 + $0x58] sm:$0xff]
        %v429 = vld [vmem:[%s3 + $0x60] sm:$0xff]
        %v430 = vld [vmem:[%s3 + $0x68] sm:$0xff]
        %v431 = vld [vmem:[%s3 + $0x70] sm:$0xff]
        %v432 = vld [vmem:[%s3 + $0x78] sm:$0xff]
        %v433 = vld [vmem:[%s4] sm:$0x1]
        %v435 = vlaneseq
        %v436 = vshrl.u32 %v435, 7
        %v437 = vsub.s32 0, %v436
        %v438 = vrot.slane %v433, %v437
        %440 = vmatprep.subr.mxu0 0.0
        %441 = vmatpush1.msra.mxu0 %v432
        %442 = vmatprep.subr.mxu0 0.0
        %443 = vmatpush1.msra.mxu0 %v431
        %444 = vmatprep.subr.mxu0 0.0
        %445 = vmatpush1.msra.mxu0 %v430
        %446 = vmatprep.subr.mxu0 0.0
        %447 = vmatpush1.msra.mxu0 %v429
        %448 = vmatprep.subr.mxu0 0.0
        %449 = vmatpush1.msra.mxu0 %v428
        %450 = vmatprep.subr.mxu0 0.0
        %451 = vmatpush1.msra.mxu0 %v427
        %452 = vmatprep.subr.mxu0 0.0
        %453 = vmatpush1.msra.mxu0 %v426
        %454 = vmatprep.subr.mxu0 0.0
        %455 = vmatpush1.msra.mxu0 %v425
        %456 = vmatprep.subr.mxu0 0.0
        %457 = vmatpush1.msra.mxu0 %v424
        %458 = vmatprep.subr.mxu0 0.0
        %459 = vmatpush1.msra.mxu0 %v423
        %460 = vmatprep.subr.mxu0 0.0
        %461 = vmatpush1.msra.mxu0 %v422
        %462 = vmatprep.subr.mxu0 0.0
        %463 = vmatpush1.msra.mxu0 %v421
        %464 = vmatprep.subr.mxu0 0.0
        %465 = vmatpush1.msra.mxu0 %v420
        %466 = vmatprep.subr.mxu0 0.0
        %467 = vmatpush1.msra.mxu0 %v419
        %468 = vmatprep.subr.mxu0 0.0
        %469 = vmatpush1.msra.mxu0 %v418
        %470 = vmatprep.subr.mxu0 0.0
        %471 = vmatpush1.msra.mxu0 %v417
        %472 = vmatprep.subr.mxu0 0.0
        %473 = vmatpush2.msra.mxu0 0.0
        %474 = vmatprep.subr.mxu0 0.0
        %475 = vmatpush2.msra.mxu0 0.0
        %476 = vmatprep.subr.mxu0 0.0
        %477 = vmatpush2.msra.mxu0 0.0
        %478 = vmatprep.subr.mxu0 0.0
        %479 = vmatpush2.msra.mxu0 0.0
        %480 = vmatprep.subr.mxu0 0.0
        %481 = vmatpush2.msra.mxu0 0.0
        %482 = vmatprep.subr.mxu0 0.0
        %483 = vmatpush2.msra.mxu0 0.0
        %484 = vmatprep.subr.mxu0 0.0
        %485 = vmatpush2.msra.mxu0 0.0
        %486 = vmatprep.subr.mxu0 0.0
        %487 = vmatpush2.msra.mxu0 0.0
        %488 = vmatprep.subr.mxu0 0.0
        %489 = vmatpush2.msra.mxu0 0.0
        %490 = vmatprep.subr.mxu0 0.0
        %491 = vmatpush2.msra.mxu0 0.0
        %492 = vmatprep.subr.mxu0 0.0
        %493 = vmatpush2.msra.mxu0 0.0
        %494 = vmatprep.subr.mxu0 0.0
        %495 = vmatpush2.msra.mxu0 0.0
        %496 = vmatprep.subr.mxu0 0.0
        %497 = vmatpush2.msra.mxu0 0.0
        %498 = vmatprep.subr.mxu0 0.0
        %499 = vmatpush2.msra.mxu0 0.0
        %500 = vmatprep.subr.mxu0 0.0
        %501 = vmatpush2.msra.mxu0 0.0
        %502 = vmatprep.subr.mxu0 0.0
        %503 = vmatpush2.msra.mxu0 0.0
        %504 = vmatprep.mubr.f32.mxu0 0.0
        %505 = vmatmul.mubr.f32.gmra.mxu0 %v416
        %v506 = vpop.f32.mrf.mxu0
        %v507 = vadd.f32 %v438, %v506
        %v508 = vpop.f32.mrf.mxu0
        %509 = vdwg.mxu0
        %510 = vst [vmem:[%s305] sm:$0xff] %v507
        %511 = vmax.xlane.f32.xlu0 %v507
        %v512 = vpop.xlane.xlu0 %511
        %v513 = vsub.f32 %v507, %v512
        %v514 = vmul.f32 %v513, 1.442695
        %v515 = vpow.pop %v514
        %516 = vadd.xlane.f32.xlu0 %v515
        %v517 = vpop.xlane.xlu0 %516
        %v518 = vlog2.pop %v517
        %v519 = vmul.f32 %v518, 0.6931472
        %v520 = vadd.f32 %v519, %v512
        %v521 = vsub.f32 %v507, %v520
        %v522 = vlaneseq
        %v523 = vshrl.u32 %v522, 7
        %v524 = vadd.s32 %v523, 8
        %v525 = vadd.s32 %v523, 16
        %v526 = vadd.s32 %v523, 24
        %v527 = vadd.s32 %v523, 32
        %v528 = vadd.s32 %v523, 40
        %v529 = vadd.s32 %v523, 48
        %v530 = vadd.s32 %v523, 56
        %v531 = vadd.s32 %v523, 64
        %v532 = vadd.s32 %v523, 72
        %v533 = vadd.s32 %v523, 80
        %v534 = vadd.s32 %v523, 88
        %v535 = vadd.s32 %v523, 96
        %v536 = vadd.s32 %v523, 104
        %v537 = vadd.s32 %v523, 112
        %v538 = vadd.s32 %v523, 120
        %v539 = vld [vmem:[%s324] sm:$0x1]
        %v540 = vlaneseq
        %v541 = vshrl.u32 %v540, 7
        %v542 = vsub.s32 0, %v541
        %v543 = vrot.slane %v539, %v542
        %vm544 = vcmp.eq.s32.totalorder %v543, %v523
        %vm545 = vcmp.eq.s32.totalorder %v543, %v524
        %vm546 = vcmp.eq.s32.totalorder %v543, %v525
        %vm547 = vcmp.eq.s32.totalorder %v543, %v526
        %vm548 = vcmp.eq.s32.totalorder %v543, %v527
        %vm549 = vcmp.eq.s32.totalorder %v543, %v528
        %vm550 = vcmp.eq.s32.totalorder %v543, %v529
        %vm551 = vcmp.eq.s32.totalorder %v543, %v530
        %vm552 = vcmp.eq.s32.totalorder %v543, %v531
        %vm553 = vcmp.eq.s32.totalorder %v543, %v532
        %vm554 = vcmp.eq.s32.totalorder %v543, %v533
        %vm555 = vcmp.eq.s32.totalorder %v543, %v534
        %vm556 = vcmp.eq.s32.totalorder %v543, %v535
        %vm557 = vcmp.eq.s32.totalorder %v543, %v536
        %vm558 = vcmp.eq.s32.totalorder %v543, %v537
        %vm559 = vcmp.eq.s32.totalorder %v543, %v538
        %v560 = vsel %vm544, 1.0, 0.0
        %v561 = vsel %vm545, 1.0, 0.0
        %v562 = vsel %vm546, 1.0, 0.0
        %v563 = vsel %vm547, 1.0, 0.0
        %v564 = vsel %vm548, 1.0, 0.0
        %v565 = vsel %vm549, 1.0, 0.0
        %v566 = vsel %vm550, 1.0, 0.0
        %v567 = vsel %vm551, 1.0, 0.0
        %v568 = vsel %vm552, 1.0, 0.0
        %v569 = vsel %vm553, 1.0, 0.0
        %v570 = vsel %vm554, 1.0, 0.0
        %v571 = vsel %vm555, 1.0, 0.0
        %v572 = vsel %vm556, 1.0, 0.0
        %v573 = vsel %vm557, 1.0, 0.0
        %v574 = vsel %vm558, 1.0, 0.0
        %v575 = vsel %vm559, 1.0, 0.0
        %576 = vmatprep.subr.mxu0 0.0
        %577 = vmatpush1.msra.mxu0 %v575
        %578 = vmatprep.subr.mxu0 0.0
        %579 = vmatpush1.msra.mxu0 %v574
        %580 = vmatprep.subr.mxu0 0.0
        %581 = vmatpush1.msra.mxu0 %v573
        %582 = vmatprep.subr.mxu0 0.0
        %583 = vmatpush1.msra.mxu0 %v572
        %584 = vmatprep.subr.mxu0 0.0
        %585 = vmatpush1.msra.mxu0 %v571
        %586 = vmatprep.subr.mxu0 0.0
        %587 = vmatpush1.msra.mxu0 %v570
        %588 = vmatprep.subr.mxu0 0.0
        %589 = vmatpush1.msra.mxu0 %v569
        %590 = vmatprep.subr.mxu0 0.0
        %591 = vmatpush1.msra.mxu0 %v568
        %592 = vmatprep.subr.mxu0 0.0
        %593 = vmatpush1.msra.mxu0 %v567
        %594 = vmatprep.subr.mxu0 0.0
        %595 = vmatpush1.msra.mxu0 %v566
        %596 = vmatprep.subr.mxu0 0.0
        %597 = vmatpush1.msra.mxu0 %v565
        %598 = vmatprep.subr.mxu0 0.0
        %599 = vmatpush1.msra.mxu0 %v564
        %600 = vmatprep.subr.mxu0 0.0
        %601 = vmatpush1.msra.mxu0 %v563
        %602 = vmatprep.subr.mxu0 0.0
        %603 = vmatpush1.msra.mxu0 %v562
        %604 = vmatprep.subr.mxu0 0.0
        %605 = vmatpush1.msra.mxu0 %v561
        %606 = vmatprep.subr.mxu0 0.0
        %607 = vmatpush1.msra.mxu0 %v560
        %608 = vmatprep.subr.mxu0 0.0
        %609 = vmatpush2.msra.mxu0 0.0
        %610 = vmatprep.subr.mxu0 0.0
        %611 = vmatpush2.msra.mxu0 0.0
        %612 = vmatprep.subr.mxu0 0.0
        %613 = vmatpush2.msra.mxu0 0.0
        %614 = vmatprep.subr.mxu0 0.0
        %615 = vmatpush2.msra.mxu0 0.0
        %616 = vmatprep.subr.mxu0 0.0
        %617 = vmatpush2.msra.mxu0 0.0
        %618 = vmatprep.subr.mxu0 0.0
        %619 = vmatpush2.msra.mxu0 0.0
        %620 = vmatprep.subr.mxu0 0.0
        %621 = vmatpush2.msra.mxu0 0.0
        %622 = vmatprep.subr.mxu0 0.0
        %623 = vmatpush2.msra.mxu0 0.0
        %624 = vmatprep.subr.mxu0 0.0
        %625 = vmatpush2.msra.mxu0 0.0
        %626 = vmatprep.subr.mxu0 0.0
        %627 = vmatpush2.msra.mxu0 0.0
        %628 = vmatprep.subr.mxu0 0.0
        %629 = vmatpush2.msra.mxu0 0.0
        %630 = vmatprep.subr.mxu0 0.0
        %631 = vmatpush2.msra.mxu0 0.0
        %632 = vmatprep.subr.mxu0 0.0
        %633 = vmatpush2.msra.mxu0 0.0
        %634 = vmatprep.subr.mxu0 0.0
        %635 = vmatpush2.msra.mxu0 0.0
        %636 = vmatprep.subr.mxu0 0.0
        %637 = vmatpush2.msra.mxu0 0.0
        %638 = vmatprep.subr.mxu0 0.0
        %639 = vmatpush2.msra.mxu0 0.0
        %640 = vmatprep.mubr.f32.mxu0 0.0
        %641 = vmatmul.mubr.f32.gmra.mxu0 %v521
        %v642 = vpop.f32.mrf.mxu0
        %v643 = vadd.f32 0.0, %v642
        %v644 = vpop.f32.mrf.mxu0
        %645 = vdwg.mxu0
        %646 = vst [vmem:[%s331] sm:$0xff] %v643
        %s647 = sand.u32 %s182, 1
        %s648 = scalar_lea.sflag [#allocation3], %s647
        %s649 = sand.u32 %s182, 1
        %s650 = smul.addr %s649, 8
        %s651 = scalar_lea.vmem [#allocation2], %s650
        %p652 = scmp.lt.s32.totalorder %s26, 1
        %s653 = scalar_select %p652, %s26, 1
        %p654 = scmp.lt.s32.totalorder %s27, 0
        %s655 = scalar_select %p654, %s27, 0
        %s656 = sadd.s32 %s655, %s653
        %s657 = smul.addr %s656, 8
        %s658 = scalar_lea.vmem %s7, %s657
        // Predicated region
        $region45: #{speech_encoder_ctc_forward.2} parent=43 // pred_check
          %p659 = pneg %p192
        $region46: #{speech_encoder_ctc_forward.2} parent=43 // pred_check_branch
          %661 = sbr.rel (%p659) target = $region48
        $region47: #{speech_encoder_ctc_forward.2} parent=43 // pred_region
          %s663 = ssub.s32 128, 128
          %664 = vsyncadd %s648, %s663
          %s665 = sadd.s32 %s27, %s26
          %s666 = smul.addr %s665, 128
          %s667 = scalar_lea.hbm %s6, %s666
          %s669 = sshll.u32 %s651, 4
          %s670 = int_to_ptr.vmem [resolvable:$true] %s669
          %672 = dma.vmem_to_hbm [thread:$0]  %s670, 128, %s667, %s648
        $region48: #{speech_encoder_ctc_forward.2} parent=43 // pred_fallthru
          _
        // Predicated region
        $region49: #{speech_encoder_ctc_forward.2} parent=43 // pred_check
          %p673 = pneg %p220
        $region50: #{speech_encoder_ctc_forward.2} parent=43 // pred_check_branch
          %675 = sbr.rel (%p673) target = $region52
        $region51: #{speech_encoder_ctc_forward.2} parent=43 // pred_region
          _
        $region52: #{speech_encoder_ctc_forward.2} parent=43 // pred_fallthru
          _
      $region44: #{speech_encoder_ctc_forward.2} parent=5 // pred_fallthru
        _
      %p676 = scmp.le.s32.totalorder 2, %s17
      // Predicated region
      $region53: #{speech_encoder_ctc_forward.2} parent=5 // pred_check
        %p677 = pneg %p676
      $region54: #{speech_encoder_ctc_forward.2} parent=5 // pred_check_branch
        %679 = sbr.rel (%p677) target = $region56
      $region55: #{speech_encoder_ctc_forward.2} parent=5 // pred_region
        %s680 = ssub.s32 %s17, 2
        // Predicated region
        $region57: #{speech_encoder_ctc_forward.2} parent=55 // pred_check
          %p681 = pneg %p198
        $region58: #{speech_encoder_ctc_forward.2} parent=55 // pred_check_branch
          %683 = sbr.rel (%p681) target = $region60
        $region59: #{speech_encoder_ctc_forward.2} parent=55 // pred_region
          %s684 = sand.u32 %s183, 1
          %s685 = scalar_lea.sflag [#allocation3], %s684
          %s686 = sand.u32 %s183, 1
          %s687 = smul.addr %s686, 8
          %s688 = scalar_lea.vmem [#allocation2], %s687
          %689 = dma.done %s685, 128
        $region60: #{speech_encoder_ctc_forward.2} parent=55 // pred_fallthru
          _
        // Predicated region
        $region61: #{speech_encoder_ctc_forward.2} parent=55 // pred_check
          %p690 = pneg %p226
        $region62: #{speech_encoder_ctc_forward.2} parent=55 // pred_check_branch
          %692 = sbr.rel (%p690) target = $region64
        $region63: #{speech_encoder_ctc_forward.2} parent=55 // pred_region
          %p693 = scmp.lt.s32.totalorder %s28, 1
          %s694 = scalar_select %p693, %s28, 1
          %p695 = scmp.lt.s32.totalorder %s29, 0
          %s696 = scalar_select %p695, %s29, 0
          %s697 = sadd.s32 %s696, %s694
          %s698 = smul.addr %s697, 8
          %s699 = scalar_lea.vmem %s7, %s698
        $region64: #{speech_encoder_ctc_forward.2} parent=55 // pred_fallthru
          _
      $region56: #{speech_encoder_ctc_forward.2} parent=5 // pred_fallthru
        _
    $region6: #{speech_encoder_ctc_forward.2} parent=1 // loop_footer
      %s21 = sadd.s32 1, %s17
    $region7: #{speech_encoder_ctc_forward.2} parent=1 // loop_footer_branch
      %16 = sbr.rel target = $region3
    $region8: #{speech_encoder_ctc_forward.2} parent=1 // loop_exit
      _
    %700 = vsyncpa [#allocation3], 1
    %s701 = scalar_lea.sflag [#allocation3], 1
    %702 = vsyncpa %s701, 1

// kernel: speech_encoder_ctc_forward.3
$region0: #{speech_encoder_ctc_forward.3}
  #allocation0 [shape = 'u32[]', space=smem, size = 0x4, offset = 0x4, fixed_abs, tag = 'smem constant byte address 0x4 - core index']
  #allocation1 [shape = 'u32[144,128]{1,0:T(1,128)}', space=vmem, size = 0x12000, scoped, tag = 'internal scratch']
  #allocation2 [shape = 'f32[2,128]{1,0:T(2,128)}', space=vmem, size = 0x400, scoped, tag = 'scratch operand']
  #allocation3 [shape = 's32[1]{0}', space=sflag, size = 0x4, scoped, tag = 'scoped memory for speech_encoder_ctc_forward.3']
  #allocation4 [shape = 'u8[512]{0}', space=smem, size = 0x200, scoped, tag = 'prefetched SMEM operand 0']
  %s0 = inlined_call_operand.vmem [shape: s32[2], index: 0, kind: input, shape index: {}]
  %s1 = inlined_call_operand.vmem [shape: f32[2,8,128], index: 1, kind: input, shape index: {}]
  %s2 = inlined_call_operand.vmem [shape: f32[2,128], index: 2, kind: input, shape index: {}]
  %s3 = inlined_call_operand.vmem [shape: f32[1,128], index: 3, kind: input, shape index: {}]
  %s4 = inlined_call_operand.vmem [shape: s32[2,1], index: 4, kind: input, shape index: {}]
  %s5 = inlined_call_operand.vmem [shape: f32[2,128], index: 5, kind: output, shape index: {}]
  %s6 = sld [smem:[#allocation0]]
  $region38: #{speech_encoder_ctc_forward.3} parent=0
    _
  %s8 = ssub.s32 1, %s6
  %s9 = scalar_select 0, %s8, %s6
  %s10 = sshll.u32 %s0, 4
  %s11 = int_to_ptr.vmem [resolvable:$true] %s10
  %13 = dma.vmem_to_smem %s11, 16, [#allocation4], [#allocation3]
  %14 = dma.done [#allocation3], 16
  %15 = sfence
  // Predicated region
  $region2: #{speech_encoder_ctc_forward.3} parent=0 // pred_check
    _
  $region3: #{speech_encoder_ctc_forward.3} parent=0 // pred_check_branch
    %17 = sbr.rel (0) target = $region5
  $region4: #{speech_encoder_ctc_forward.3} parent=0 // pred_region
    _
  $region5: #{speech_encoder_ctc_forward.3} parent=0 // pred_fallthru
    _
  // Predicated region
  $region6: #{speech_encoder_ctc_forward.3} parent=0 // pred_check
    _
  $region7: #{speech_encoder_ctc_forward.3} parent=0 // pred_check_branch
    %19 = sbr.rel (0) target = $region9
  $region8: #{speech_encoder_ctc_forward.3} parent=0 // pred_region
    _
  $region9: #{speech_encoder_ctc_forward.3} parent=0 // pred_fallthru
    _
  // Predicated region
  $region10: #{speech_encoder_ctc_forward.3} parent=0 // pred_check
    _
  $region11: #{speech_encoder_ctc_forward.3} parent=0 // pred_check_branch
    %21 = sbr.rel (0) target = $region13
  $region12: #{speech_encoder_ctc_forward.3} parent=0 // pred_region
    _
  $region13: #{speech_encoder_ctc_forward.3} parent=0 // pred_fallthru
    _
  // Predicated region
  $region14: #{speech_encoder_ctc_forward.3} parent=0 // pred_check
    _
  $region15: #{speech_encoder_ctc_forward.3} parent=0 // pred_check_branch
    %23 = sbr.rel (0) target = $region17
  $region16: #{speech_encoder_ctc_forward.3} parent=0 // pred_region
    _
  $region17: #{speech_encoder_ctc_forward.3} parent=0 // pred_fallthru
    _
  %s24 = smul.u32 0, 8
  %s25 = sld [smem:[#allocation4]]
  %s26 = sld [smem:[#allocation4 + $0x1]]
  %p27 = scmp.eq.s32.totalorder 0, 0
  // Predicated region
  $region18: #{speech_encoder_ctc_forward.3} parent=0 // pred_check
    %p28 = pneg %p27
  $region19: #{speech_encoder_ctc_forward.3} parent=0 // pred_check_branch
    %30 = sbr.rel (%p28) target = $region21
  $region20: #{speech_encoder_ctc_forward.3} parent=0 // pred_region
    %31 = vst [vmem:[#allocation2] sm:$0x3] -100000.0
    %32 = vst [vmem:[%s5] sm:$0x3] -100000.0
  $region21: #{speech_encoder_ctc_forward.3} parent=0 // pred_fallthru
    _
  %p33 = scmp.lt.s32.totalorder %s24, %s26
  %s34 = ssub.s32 %s25, 1
  %s35 = sadd.s32 %s24, 8
  %p36 = scmp.lt.s32.totalorder %s34, %s35
  %s37 = ssub.s32 %s26, 1
  %p38 = scmp.ge.s32.totalorder %s37, %s24
  %p39 = pnand %p36, %p38
  %p40 = pneg %p39
  %v41 = vld [vmem:[%s2] sm:$0x3]
  %v42 = vld [vmem:[%s3] sm:$0x1]
  %v43 = vld [vmem:[%s4] sm:$0x3]
  %v44 = vlaneseq
  %v45 = vand.u32 %v44, 127
  %p46 = pnand %p33, %p40
  %p47 = pneg %p46
  // Predicated region
  $region22: #{speech_encoder_ctc_forward.3} parent=0 // pred_check
    _
  $region23: #{speech_encoder_ctc_forward.3} parent=0 // pred_check_branch
    %49 = sbr.rel (%p46) target = $region25
  $region24: #{speech_encoder_ctc_forward.3} parent=0 // pred_region
    %v50 = vld [vmem:[%s1] sm:$0x1]
    %v51 = vld [vmem:[%s1 + $0x8] sm:$0x1]
    %v52 = vld [vmem:[#allocation2] sm:$0x3]
    %53 = vrot.lane.b32.xlu0 %v52, 1
    %v54 = vpop.permute.xlu0 %53
    %v56 = vlaneseq
    %v57 = vshrl.u32 %v56, 7
    %v58 = vsub.s32 0, %v57
    %v59 = vrot.slane %v42, %v58
    %v61 = vadd.f32 %v54, %v59
    %62 = vrot.lane.b32.xlu0 %v52, 2
    %v63 = vpop.permute.xlu0 %62
    %v64 = vadd.f32 %v63, %v41
    %v65 = vmax.f32 %v61, %v64
    %v66 = vmax.f32 %v52, %v65
    %v67 = vsub.f32 %v52, %v66
    %v68 = vmul.f32 %v67, 1.442695
    %v69 = vpow.pop %v68
    %v70 = vsub.f32 %v61, %v66
    %v71 = vmul.f32 %v70, 1.442695
    %v72 = vpow.pop %v71
    %v73 = vadd.f32 %v69, %v72
    %v74 = vsub.f32 %v64, %v66
    %v75 = vmul.f32 %v74, 1.442695
    %v76 = vpow.pop %v75
    %v77 = vadd.f32 %v73, %v76
    %v78 = vlog2.pop %v77
    %v79 = vmul.f32 %v78, 0.6931472
    %v80 = vadd.f32 %v66, %v79
    %v83 = vrot.slane %v51, 7
    %vm84 = vcmask 1041409
    %v85 = vsel %vm84, %v83, %v50
    %v87 = vadd.f32 %v80, %v85
    %vm88 = vcmp.lt.s32.totalorder %v45, 2
    %v89 = vsel %vm88, %v85, -100000.0
    %p90 = scmp.eq.s32.totalorder %s24, 0
    %s91 = scalar_select %p90, 1, 0
    %v92 = vstv %s91
    %vm93 = vcmp.eq.s32.totalorder %v92, 1
    %v94 = vsel %vm93, %v89, %v87
    %95 = vst [vmem:[#allocation2] sm:$0x3] %v94
    %v96 = vsub.s32 %v43, 1
    %v97 = vstv %s24
    %vm98 = vcmp.eq.s32.totalorder %v97, %v96
    %v99 = vld [vmem:[%s5] sm:$0x3]
    %v100 = vsel %vm98, 1, 0
    %101 = vset.pattern.permute.xlu0 0
    %102 = vperm.xlu0 %101, %v100
    %v103 = vpop.permute.xlu0 %102
    %vm104 = vcmp.eq.s32.totalorder %v103, 1
    %v105 = vsel %vm104, %v94, %v99
    %106 = vst [vmem:[%s5] sm:$0x3] %v105
    %s107 = sadd.s32 %s24, 1
    %v108 = vld [vmem:[%s1 + $0x1] sm:$0x1]
    %v109 = vld [vmem:[%s1 + $0x9] sm:$0x1]
    %v110 = vld [vmem:[#allocation2] sm:$0x3]
    %111 = vrot.lane.b32.xlu0 %v110, 1
    %v112 = vpop.permute.xlu0 %111
    %v113 = vadd.f32 %v112, %v59
    %114 = vrot.lane.b32.xlu0 %v110, 2
    %v115 = vpop.permute.xlu0 %114
    %v116 = vadd.f32 %v115, %v41
    %v117 = vmax.f32 %v113, %v116
    %v118 = vmax.f32 %v110, %v117
    %v119 = vsub.f32 %v110, %v118
    %v120 = vmul.f32 %v119, 1.442695
    %v121 = vpow.pop %v120
    %v122 = vsub.f32 %v113, %v118
    %v123 = vmul.f32 %v122, 1.442695
    %v124 = vpow.pop %v123
    %v125 = vadd.f32 %v121, %v124
    %v126 = vsub.f32 %v116, %v118
    %v127 = vmul.f32 %v126, 1.442695
    %v128 = vpow.pop %v127
    %v129 = vadd.f32 %v125, %v128
    %v130 = vlog2.pop %v129
    %v131 = vmul.f32 %v130, 0.6931472
    %v132 = vadd.f32 %v118, %v131
    %v135 = vrot.slane %v109, 7
    %v136 = vsel %vm84, %v135, %v108
    %v138 = vadd.f32 %v132, %v136
    %v139 = vsel %vm88, %v136, -100000.0
    %p140 = scmp.eq.s32.totalorder %s107, 0
    %s141 = scalar_select %p140, 1, 0
    %v142 = vstv %s141
    %vm143 = vcmp.eq.s32.totalorder %v142, 1
    %v144 = vsel %vm143, %v139, %v138
    %145 = vst [vmem:[#allocation2] sm:$0x3] %v144
    %v146 = vstv %s107
    %vm147 = vcmp.eq.s32.totalorder %v146, %v96
    %v148 = vld [vmem:[%s5] sm:$0x3]
    %v149 = vsel %vm147, 1, 0
    %150 = vset.pattern.permute.xlu0 0
    %151 = vperm.xlu0 %150, %v149
    %v152 = vpop.permute.xlu0 %151
    %vm153 = vcmp.eq.s32.totalorder %v152, 1
    %v154 = vsel %vm153, %v144, %v148
    %155 = vst [vmem:[%s5] sm:$0x3] %v154
    %s156 = sadd.s32 %s24, 2
    %v157 = vld [vmem:[%s1 + $0x2] sm:$0x1]
    %v158 = vld [vmem:[%s1 + $0xa] sm:$0x1]
    %v159 = vld [vmem:[#allocation2] sm:$0x3]
    %160 = vrot.lane.b32.xlu0 %v159, 1
    %v161 = vpop.permute.xlu0 %160
    %v162 = vadd.f32 %v161, %v59
    %163 = vrot.lane.b32.xlu0 %v159, 2
    %v164 = vpop.permute.xlu0 %163
    %v165 = vadd.f32 %v164, %v41
    %v166 = vmax.f32 %v162, %v165
    %v167 = vmax.f32 %v159, %v166
    %v168 = vsub.f32 %v159, %v167
    %v169 = vmul.f32 %v168, 1.442695
    %v170 = vpow.pop %v169
    %v171 = vsub.f32 %v162, %v167
    %v172 = vmul.f32 %v171, 1.442695
    %v173 = vpow.pop %v172
    %v174 = vadd.f32 %v170, %v173
    %v175 = vsub.f32 %v165, %v167
    %v176 = vmul.f32 %v175, 1.442695
    %v177 = vpow.pop %v176
    %v178 = vadd.f32 %v174, %v177
    %v179 = vlog2.pop %v178
    %v180 = vmul.f32 %v179, 0.6931472
    %v181 = vadd.f32 %v167, %v180
    %v184 = vrot.slane %v158, 7
    %v185 = vsel %vm84, %v184, %v157
    %v187 = vadd.f32 %v181, %v185
    %v188 = vsel %vm88, %v185, -100000.0
    %p189 = scmp.eq.s32.totalorder %s156, 0
    %s190 = scalar_select %p189, 1, 0
    %v191 = vstv %s190
    %vm192 = vcmp.eq.s32.totalorder %v191, 1
    %v193 = vsel %vm192, %v188, %v187
    %194 = vst [vmem:[#allocation2] sm:$0x3] %v193
    %v195 = vstv %s156
    %vm196 = vcmp.eq.s32.totalorder %v195, %v96
    %v197 = vld [vmem:[%s5] sm:$0x3]
    %v198 = vsel %vm196, 1, 0
    %199 = vset.pattern.permute.xlu0 0
    %200 = vperm.xlu0 %199, %v198
    %v201 = vpop.permute.xlu0 %200
    %vm202 = vcmp.eq.s32.totalorder %v201, 1
    %v203 = vsel %vm202, %v193, %v197
    %204 = vst [vmem:[%s5] sm:$0x3] %v203
    %s205 = sadd.s32 %s24, 3
    %v206 = vld [vmem:[%s1 + $0x3] sm:$0x1]
    %v207 = vld [vmem:[%s1 + $0xb] sm:$0x1]
    %v208 = vld [vmem:[#allocation2] sm:$0x3]
    %209 = vrot.lane.b32.xlu0 %v208, 1
    %v210 = vpop.permute.xlu0 %209
    %v211 = vadd.f32 %v210, %v59
    %212 = vrot.lane.b32.xlu0 %v208, 2
    %v213 = vpop.permute.xlu0 %212
    %v214 = vadd.f32 %v213, %v41
    %v215 = vmax.f32 %v211, %v214
    %v216 = vmax.f32 %v208, %v215
    %v217 = vsub.f32 %v208, %v216
    %v218 = vmul.f32 %v217, 1.442695
    %v219 = vpow.pop %v218
    %v220 = vsub.f32 %v211, %v216
    %v221 = vmul.f32 %v220, 1.442695
    %v222 = vpow.pop %v221
    %v223 = vadd.f32 %v219, %v222
    %v224 = vsub.f32 %v214, %v216
    %v225 = vmul.f32 %v224, 1.442695
    %v226 = vpow.pop %v225
    %v227 = vadd.f32 %v223, %v226
    %v228 = vlog2.pop %v227
    %v229 = vmul.f32 %v228, 0.6931472
    %v230 = vadd.f32 %v216, %v229
    %v233 = vrot.slane %v207, 7
    %v234 = vsel %vm84, %v233, %v206
    %v236 = vadd.f32 %v230, %v234
    %v237 = vsel %vm88, %v234, -100000.0
    %p238 = scmp.eq.s32.totalorder %s205, 0
    %s239 = scalar_select %p238, 1, 0
    %v240 = vstv %s239
    %vm241 = vcmp.eq.s32.totalorder %v240, 1
    %v242 = vsel %vm241, %v237, %v236
    %243 = vst [vmem:[#allocation2] sm:$0x3] %v242
    %v244 = vstv %s205
    %vm245 = vcmp.eq.s32.totalorder %v244, %v96
    %v246 = vld [vmem:[%s5] sm:$0x3]
    %v247 = vsel %vm245, 1, 0
    %248 = vset.pattern.permute.xlu0 0
    %249 = vperm.xlu0 %248, %v247
    %v250 = vpop.permute.xlu0 %249
    %vm251 = vcmp.eq.s32.totalorder %v250, 1
    %v252 = vsel %vm251, %v242, %v246
    %253 = vst [vmem:[%s5] sm:$0x3] %v252
    %s254 = sadd.s32 %s24, 4
    %v255 = vld [vmem:[%s1 + $0x4] sm:$0x1]
    %v256 = vld [vmem:[%s1 + $0xc] sm:$0x1]
    %v257 = vld [vmem:[#allocation2] sm:$0x3]
    %258 = vrot.lane.b32.xlu0 %v257, 1
    %v259 = vpop.permute.xlu0 %258
    %v260 = vadd.f32 %v259, %v59
    %261 = vrot.lane.b32.xlu0 %v257, 2
    %v262 = vpop.permute.xlu0 %261
    %v263 = vadd.f32 %v262, %v41
    %v264 = vmax.f32 %v260, %v263
    %v265 = vmax.f32 %v257, %v264
    %v266 = vsub.f32 %v257, %v265
    %v267 = vmul.f32 %v266, 1.442695
    %v268 = vpow.pop %v267
    %v269 = vsub.f32 %v260, %v265
    %v270 = vmul.f32 %v269, 1.442695
    %v271 = vpow.pop %v270
    %v272 = vadd.f32 %v268, %v271
    %v273 = vsub.f32 %v263, %v265
    %v274 = vmul.f32 %v273, 1.442695
    %v275 = vpow.pop %v274
    %v276 = vadd.f32 %v272, %v275
    %v277 = vlog2.pop %v276
    %v278 = vmul.f32 %v277, 0.6931472
    %v279 = vadd.f32 %v265, %v278
    %v282 = vrot.slane %v256, 7
    %v283 = vsel %vm84, %v282, %v255
    %v285 = vadd.f32 %v279, %v283
    %v286 = vsel %vm88, %v283, -100000.0
    %p287 = scmp.eq.s32.totalorder %s254, 0
    %s288 = scalar_select %p287, 1, 0
    %v289 = vstv %s288
    %vm290 = vcmp.eq.s32.totalorder %v289, 1
    %v291 = vsel %vm290, %v286, %v285
    %292 = vst [vmem:[#allocation2] sm:$0x3] %v291
    %v293 = vstv %s254
    %vm294 = vcmp.eq.s32.totalorder %v293, %v96
    %v295 = vld [vmem:[%s5] sm:$0x3]
    %v296 = vsel %vm294, 1, 0
    %297 = vset.pattern.permute.xlu0 0
    %298 = vperm.xlu0 %297, %v296
    %v299 = vpop.permute.xlu0 %298
    %vm300 = vcmp.eq.s32.totalorder %v299, 1
    %v301 = vsel %vm300, %v291, %v295
    %302 = vst [vmem:[%s5] sm:$0x3] %v301
    %s303 = sadd.s32 %s24, 5
    %v304 = vld [vmem:[%s1 + $0x5] sm:$0x1]
    %v305 = vld [vmem:[%s1 + $0xd] sm:$0x1]
    %v306 = vld [vmem:[#allocation2] sm:$0x3]
    %307 = vrot.lane.b32.xlu0 %v306, 1
    %v308 = vpop.permute.xlu0 %307
    %v309 = vadd.f32 %v308, %v59
    %310 = vrot.lane.b32.xlu0 %v306, 2
    %v311 = vpop.permute.xlu0 %310
    %v312 = vadd.f32 %v311, %v41
    %v313 = vmax.f32 %v309, %v312
    %v314 = vmax.f32 %v306, %v313
    %v315 = vsub.f32 %v306, %v314
    %v316 = vmul.f32 %v315, 1.442695
    %v317 = vpow.pop %v316
    %v318 = vsub.f32 %v309, %v314
    %v319 = vmul.f32 %v318, 1.442695
    %v320 = vpow.pop %v319
    %v321 = vadd.f32 %v317, %v320
    %v322 = vsub.f32 %v312, %v314
    %v323 = vmul.f32 %v322, 1.442695
    %v324 = vpow.pop %v323
    %v325 = vadd.f32 %v321, %v324
    %v326 = vlog2.pop %v325
    %v327 = vmul.f32 %v326, 0.6931472
    %v328 = vadd.f32 %v314, %v327
    %v331 = vrot.slane %v305, 7
    %v332 = vsel %vm84, %v331, %v304
    %v334 = vadd.f32 %v328, %v332
    %v335 = vsel %vm88, %v332, -100000.0
    %p336 = scmp.eq.s32.totalorder %s303, 0
    %s337 = scalar_select %p336, 1, 0
    %v338 = vstv %s337
    %vm339 = vcmp.eq.s32.totalorder %v338, 1
    %v340 = vsel %vm339, %v335, %v334
    %341 = vst [vmem:[#allocation2] sm:$0x3] %v340
    %v342 = vstv %s303
    %vm343 = vcmp.eq.s32.totalorder %v342, %v96
    %v344 = vld [vmem:[%s5] sm:$0x3]
    %v345 = vsel %vm343, 1, 0
    %346 = vset.pattern.permute.xlu0 0
    %347 = vperm.xlu0 %346, %v345
    %v348 = vpop.permute.xlu0 %347
    %vm349 = vcmp.eq.s32.totalorder %v348, 1
    %v350 = vsel %vm349, %v340, %v344
    %351 = vst [vmem:[%s5] sm:$0x3] %v350
    %s352 = sadd.s32 %s24, 6
    %v353 = vld [vmem:[%s1 + $0x6] sm:$0x1]
    %v354 = vld [vmem:[%s1 + $0xe] sm:$0x1]
    %v355 = vld [vmem:[#allocation2] sm:$0x3]
    %356 = vrot.lane.b32.xlu0 %v355, 1
    %v357 = vpop.permute.xlu0 %356
    %v358 = vadd.f32 %v357, %v59
    %359 = vrot.lane.b32.xlu0 %v355, 2
    %v360 = vpop.permute.xlu0 %359
    %v361 = vadd.f32 %v360, %v41
    %v362 = vmax.f32 %v358, %v361
    %v363 = vmax.f32 %v355, %v362
    %v364 = vsub.f32 %v355, %v363
    %v365 = vmul.f32 %v364, 1.442695
    %v366 = vpow.pop %v365
    %v367 = vsub.f32 %v358, %v363
    %v368 = vmul.f32 %v367, 1.442695
    %v369 = vpow.pop %v368
    %v370 = vadd.f32 %v366, %v369
    %v371 = vsub.f32 %v361, %v363
    %v372 = vmul.f32 %v371, 1.442695
    %v373 = vpow.pop %v372
    %v374 = vadd.f32 %v370, %v373
    %v375 = vlog2.pop %v374
    %v376 = vmul.f32 %v375, 0.6931472
    %v377 = vadd.f32 %v363, %v376
    %v380 = vrot.slane %v354, 7
    %v381 = vsel %vm84, %v380, %v353
    %v383 = vadd.f32 %v377, %v381
    %v384 = vsel %vm88, %v381, -100000.0
    %p385 = scmp.eq.s32.totalorder %s352, 0
    %s386 = scalar_select %p385, 1, 0
    %v387 = vstv %s386
    %vm388 = vcmp.eq.s32.totalorder %v387, 1
    %v389 = vsel %vm388, %v384, %v383
    %390 = vst [vmem:[#allocation2] sm:$0x3] %v389
    %v391 = vstv %s352
    %vm392 = vcmp.eq.s32.totalorder %v391, %v96
    %v393 = vld [vmem:[%s5] sm:$0x3]
    %v394 = vsel %vm392, 1, 0
    %395 = vset.pattern.permute.xlu0 0
    %396 = vperm.xlu0 %395, %v394
    %v397 = vpop.permute.xlu0 %396
    %vm398 = vcmp.eq.s32.totalorder %v397, 1
    %v399 = vsel %vm398, %v389, %v393
    %400 = vst [vmem:[%s5] sm:$0x3] %v399
    %s401 = sadd.s32 %s24, 7
    %v402 = vld [vmem:[%s1 + $0x7] sm:$0x1]
    %v403 = vld [vmem:[%s1 + $0xf] sm:$0x1]
    %v404 = vld [vmem:[#allocation2] sm:$0x3]
    %405 = vrot.lane.b32.xlu0 %v404, 1
    %v406 = vpop.permute.xlu0 %405
    %v407 = vadd.f32 %v406, %v59
    %408 = vrot.lane.b32.xlu0 %v404, 2
    %v409 = vpop.permute.xlu0 %408
    %v410 = vadd.f32 %v409, %v41
    %v411 = vmax.f32 %v407, %v410
    %v412 = vmax.f32 %v404, %v411
    %v413 = vsub.f32 %v404, %v412
    %v414 = vmul.f32 %v413, 1.442695
    %v415 = vpow.pop %v414
    %v416 = vsub.f32 %v407, %v412
    %v417 = vmul.f32 %v416, 1.442695
    %v418 = vpow.pop %v417
    %v419 = vadd.f32 %v415, %v418
    %v420 = vsub.f32 %v410, %v412
    %v421 = vmul.f32 %v420, 1.442695
    %v422 = vpow.pop %v421
    %v423 = vadd.f32 %v419, %v422
    %v424 = vlog2.pop %v423
    %v425 = vmul.f32 %v424, 0.6931472
    %v426 = vadd.f32 %v412, %v425
    %v429 = vrot.slane %v403, 7
    %v430 = vsel %vm84, %v429, %v402
    %v432 = vadd.f32 %v426, %v430
    %v433 = vsel %vm88, %v430, -100000.0
    %p434 = scmp.eq.s32.totalorder %s401, 0
    %s435 = scalar_select %p434, 1, 0
    %v436 = vstv %s435
    %vm437 = vcmp.eq.s32.totalorder %v436, 1
    %v438 = vsel %vm437, %v433, %v432
    %439 = vst [vmem:[#allocation2] sm:$0x3] %v438
    %v440 = vstv %s401
    %vm441 = vcmp.eq.s32.totalorder %v440, %v96
    %v442 = vld [vmem:[%s5] sm:$0x3]
    %v443 = vsel %vm441, 1, 0
    %444 = vset.pattern.permute.xlu0 0
    %445 = vperm.xlu0 %444, %v443
    %v446 = vpop.permute.xlu0 %445
    %vm447 = vcmp.eq.s32.totalorder %v446, 1
    %v448 = vsel %vm447, %v438, %v442
    %449 = vst [vmem:[%s5] sm:$0x3] %v448
  $region25: #{speech_encoder_ctc_forward.3} parent=0 // pred_fallthru
    _
  %p450 = pneg %p40
  %p451 = pnand %p33, %p450
  %p452 = pneg %p451
  // Predicated region
  $region26: #{speech_encoder_ctc_forward.3} parent=0 // pred_check
    _
  $region27: #{speech_encoder_ctc_forward.3} parent=0 // pred_check_branch
    %454 = sbr.rel (%p451) target = $region29
  $region28: #{speech_encoder_ctc_forward.3} parent=0 // pred_region
    %v455 = vld [vmem:[%s1] sm:$0x1]
    %v456 = vld [vmem:[%s1 + $0x8] sm:$0x1]
    %v457 = vld [vmem:[#allocation2] sm:$0x3]
    %458 = vrot.lane.b32.xlu0 %v457, 1
    %v459 = vpop.permute.xlu0 %458
    %v461 = vlaneseq
    %v462 = vshrl.u32 %v461, 7
    %v463 = vsub.s32 0, %v462
    %v464 = vrot.slane %v42, %v463
    %v466 = vadd.f32 %v459, %v464
    %467 = vrot.lane.b32.xlu0 %v457, 2
    %v468 = vpop.permute.xlu0 %467
    %v469 = vadd.f32 %v468, %v41
    %v470 = vmax.f32 %v466, %v469
    %v471 = vmax.f32 %v457, %v470
    %v472 = vsub.f32 %v457, %v471
    %v473 = vmul.f32 %v472, 1.442695
    %v474 = vpow.pop %v473
    %v475 = vsub.f32 %v466, %v471
    %v476 = vmul.f32 %v475, 1.442695
    %v477 = vpow.pop %v476
    %v478 = vadd.f32 %v474, %v477
    %v479 = vsub.f32 %v469, %v471
    %v480 = vmul.f32 %v479, 1.442695
    %v481 = vpow.pop %v480
    %v482 = vadd.f32 %v478, %v481
    %v483 = vlog2.pop %v482
    %v484 = vmul.f32 %v483, 0.6931472
    %v485 = vadd.f32 %v471, %v484
    %v488 = vrot.slane %v456, 7
    %vm489 = vcmask 1041409
    %v490 = vsel %vm489, %v488, %v455
    %v492 = vadd.f32 %v485, %v490
    %vm493 = vcmp.lt.s32.totalorder %v45, 2
    %v494 = vsel %vm493, %v490, -100000.0
    %p495 = scmp.eq.s32.totalorder %s24, 0
    %s496 = scalar_select %p495, 1, 0
    %v497 = vstv %s496
    %vm498 = vcmp.eq.s32.totalorder %v497, 1
    %v499 = vsel %vm498, %v494, %v492
    %500 = vst [vmem:[#allocation2] sm:$0x3] %v499
    %s501 = sadd.s32 %s24, 1
    %v502 = vld [vmem:[%s1 + $0x1] sm:$0x1]
    %v503 = vld [vmem:[%s1 + $0x9] sm:$0x1]
    %v504 = vld [vmem:[#allocation2] sm:$0x3]
    %505 = vrot.lane.b32.xlu0 %v504, 1
    %v506 = vpop.permute.xlu0 %505
    %v507 = vadd.f32 %v506, %v464
    %508 = vrot.lane.b32.xlu0 %v504, 2
    %v509 = vpop.permute.xlu0 %508
    %v510 = vadd.f32 %v509, %v41
    %v511 = vmax.f32 %v507, %v510
    %v512 = vmax.f32 %v504, %v511
    %v513 = vsub.f32 %v504, %v512
    %v514 = vmul.f32 %v513, 1.442695
    %v515 = vpow.pop %v514
    %v516 = vsub.f32 %v507, %v512
    %v517 = vmul.f32 %v516, 1.442695
    %v518 = vpow.pop %v517
    %v519 = vadd.f32 %v515, %v518
    %v520 = vsub.f32 %v510, %v512
    %v521 = vmul.f32 %v520, 1.442695
    %v522 = vpow.pop %v521
    %v523 = vadd.f32 %v519, %v522
    %v524 = vlog2.pop %v523
    %v525 = vmul.f32 %v524, 0.6931472
    %v526 = vadd.f32 %v512, %v525
    %v529 = vrot.slane %v503, 7
    %v530 = vsel %vm489, %v529, %v502
    %v532 = vadd.f32 %v526, %v530
    %v533 = vsel %vm493, %v530, -100000.0
    %p534 = scmp.eq.s32.totalorder %s501, 0
    %s535 = scalar_select %p534, 1, 0
    %v536 = vstv %s535
    %vm537 = vcmp.eq.s32.totalorder %v536, 1
    %v538 = vsel %vm537, %v533, %v532
    %539 = vst [vmem:[#allocation2] sm:$0x3] %v538
    %s540 = sadd.s32 %s24, 2
    %v541 = vld [vmem:[%s1 + $0x2] sm:$0x1]
    %v542 = vld [vmem:[%s1 + $0xa] sm:$0x1]
    %v543 = vld [vmem:[#allocation2] sm:$0x3]
    %544 = vrot.lane.b32.xlu0 %v543, 1
    %v545 = vpop.permute.xlu0 %544
    %v546 = vadd.f32 %v545, %v464
    %547 = vrot.lane.b32.xlu0 %v543, 2
    %v548 = vpop.permute.xlu0 %547
    %v549 = vadd.f32 %v548, %v41
    %v550 = vmax.f32 %v546, %v549
    %v551 = vmax.f32 %v543, %v550
    %v552 = vsub.f32 %v543, %v551
    %v553 = vmul.f32 %v552, 1.442695
    %v554 = vpow.pop %v553
    %v555 = vsub.f32 %v546, %v551
    %v556 = vmul.f32 %v555, 1.442695
    %v557 = vpow.pop %v556
    %v558 = vadd.f32 %v554, %v557
    %v559 = vsub.f32 %v549, %v551
    %v560 = vmul.f32 %v559, 1.442695
    %v561 = vpow.pop %v560
    %v562 = vadd.f32 %v558, %v561
    %v563 = vlog2.pop %v562
    %v564 = vmul.f32 %v563, 0.6931472
    %v565 = vadd.f32 %v551, %v564
    %v568 = vrot.slane %v542, 7
    %v569 = vsel %vm489, %v568, %v541
    %v571 = vadd.f32 %v565, %v569
    %v572 = vsel %vm493, %v569, -100000.0
    %p573 = scmp.eq.s32.totalorder %s540, 0
    %s574 = scalar_select %p573, 1, 0
    %v575 = vstv %s574
    %vm576 = vcmp.eq.s32.totalorder %v575, 1
    %v577 = vsel %vm576, %v572, %v571
    %578 = vst [vmem:[#allocation2] sm:$0x3] %v577
    %s579 = sadd.s32 %s24, 3
    %v580 = vld [vmem:[%s1 + $0x3] sm:$0x1]
    %v581 = vld [vmem:[%s1 + $0xb] sm:$0x1]
    %v582 = vld [vmem:[#allocation2] sm:$0x3]
    %583 = vrot.lane.b32.xlu0 %v582, 1
    %v584 = vpop.permute.xlu0 %583
    %v585 = vadd.f32 %v584, %v464
    %586 = vrot.lane.b32.xlu0 %v582, 2
    %v587 = vpop.permute.xlu0 %586
    %v588 = vadd.f32 %v587, %v41
    %v589 = vmax.f32 %v585, %v588
    %v590 = vmax.f32 %v582, %v589
    %v591 = vsub.f32 %v582, %v590
    %v592 = vmul.f32 %v591, 1.442695
    %v593 = vpow.pop %v592
    %v594 = vsub.f32 %v585, %v590
    %v595 = vmul.f32 %v594, 1.442695
    %v596 = vpow.pop %v595
    %v597 = vadd.f32 %v593, %v596
    %v598 = vsub.f32 %v588, %v590
    %v599 = vmul.f32 %v598, 1.442695
    %v600 = vpow.pop %v599
    %v601 = vadd.f32 %v597, %v600
    %v602 = vlog2.pop %v601
    %v603 = vmul.f32 %v602, 0.6931472
    %v604 = vadd.f32 %v590, %v603
    %v607 = vrot.slane %v581, 7
    %v608 = vsel %vm489, %v607, %v580
    %v610 = vadd.f32 %v604, %v608
    %v611 = vsel %vm493, %v608, -100000.0
    %p612 = scmp.eq.s32.totalorder %s579, 0
    %s613 = scalar_select %p612, 1, 0
    %v614 = vstv %s613
    %vm615 = vcmp.eq.s32.totalorder %v614, 1
    %v616 = vsel %vm615, %v611, %v610
    %617 = vst [vmem:[#allocation2] sm:$0x3] %v616
    %s618 = sadd.s32 %s24, 4
    %v619 = vld [vmem:[%s1 + $0x4] sm:$0x1]
    %v620 = vld [vmem:[%s1 + $0xc] sm:$0x1]
    %v621 = vld [vmem:[#allocation2] sm:$0x3]
    %622 = vrot.lane.b32.xlu0 %v621, 1
    %v623 = vpop.permute.xlu0 %622
    %v624 = vadd.f32 %v623, %v464
    %625 = vrot.lane.b32.xlu0 %v621, 2
    %v626 = vpop.permute.xlu0 %625
    %v627 = vadd.f32 %v626, %v41
    %v628 = vmax.f32 %v624, %v627
    %v629 = vmax.f32 %v621, %v628
    %v630 = vsub.f32 %v621, %v629
    %v631 = vmul.f32 %v630, 1.442695
    %v632 = vpow.pop %v631
    %v633 = vsub.f32 %v624, %v629
    %v634 = vmul.f32 %v633, 1.442695
    %v635 = vpow.pop %v634
    %v636 = vadd.f32 %v632, %v635
    %v637 = vsub.f32 %v627, %v629
    %v638 = vmul.f32 %v637, 1.442695
    %v639 = vpow.pop %v638
    %v640 = vadd.f32 %v636, %v639
    %v641 = vlog2.pop %v640
    %v642 = vmul.f32 %v641, 0.6931472
    %v643 = vadd.f32 %v629, %v642
    %v646 = vrot.slane %v620, 7
    %v647 = vsel %vm489, %v646, %v619
    %v649 = vadd.f32 %v643, %v647
    %v650 = vsel %vm493, %v647, -100000.0
    %p651 = scmp.eq.s32.totalorder %s618, 0
    %s652 = scalar_select %p651, 1, 0
    %v653 = vstv %s652
    %vm654 = vcmp.eq.s32.totalorder %v653, 1
    %v655 = vsel %vm654, %v650, %v649
    %656 = vst [vmem:[#allocation2] sm:$0x3] %v655
    %s657 = sadd.s32 %s24, 5
    %v658 = vld [vmem:[%s1 + $0x5] sm:$0x1]
    %v659 = vld [vmem:[%s1 + $0xd] sm:$0x1]
    %v660 = vld [vmem:[#allocation2] sm:$0x3]
    %661 = vrot.lane.b32.xlu0 %v660, 1
    %v662 = vpop.permute.xlu0 %661
    %v663 = vadd.f32 %v662, %v464
    %664 = vrot.lane.b32.xlu0 %v660, 2
    %v665 = vpop.permute.xlu0 %664
    %v666 = vadd.f32 %v665, %v41
    %v667 = vmax.f32 %v663, %v666
    %v668 = vmax.f32 %v660, %v667
    %v669 = vsub.f32 %v660, %v668
    %v670 = vmul.f32 %v669, 1.442695
    %v671 = vpow.pop %v670
    %v672 = vsub.f32 %v663, %v668
    %v673 = vmul.f32 %v672, 1.442695
    %v674 = vpow.pop %v673
    %v675 = vadd.f32 %v671, %v674
    %v676 = vsub.f32 %v666, %v668
    %v677 = vmul.f32 %v676, 1.442695
    %v678 = vpow.pop %v677
    %v679 = vadd.f32 %v675, %v678
    %v680 = vlog2.pop %v679
    %v681 = vmul.f32 %v680, 0.6931472
    %v682 = vadd.f32 %v668, %v681
    %v685 = vrot.slane %v659, 7
    %v686 = vsel %vm489, %v685, %v658
    %v688 = vadd.f32 %v682, %v686
    %v689 = vsel %vm493, %v686, -100000.0
    %p690 = scmp.eq.s32.totalorder %s657, 0
    %s691 = scalar_select %p690, 1, 0
    %v692 = vstv %s691
    %vm693 = vcmp.eq.s32.totalorder %v692, 1
    %v694 = vsel %vm693, %v689, %v688
    %695 = vst [vmem:[#allocation2] sm:$0x3] %v694
    %s696 = sadd.s32 %s24, 6
    %v697 = vld [vmem:[%s1 + $0x6] sm:$0x1]
    %v698 = vld [vmem:[%s1 + $0xe] sm:$0x1]
    %v699 = vld [vmem:[#allocation2] sm:$0x3]
    %700 = vrot.lane.b32.xlu0 %v699, 1
    %v701 = vpop.permute.xlu0 %700
    %v702 = vadd.f32 %v701, %v464
    %703 = vrot.lane.b32.xlu0 %v699, 2
    %v704 = vpop.permute.xlu0 %703
    %v705 = vadd.f32 %v704, %v41
    %v706 = vmax.f32 %v702, %v705
    %v707 = vmax.f32 %v699, %v706
    %v708 = vsub.f32 %v699, %v707
    %v709 = vmul.f32 %v708, 1.442695
    %v710 = vpow.pop %v709
    %v711 = vsub.f32 %v702, %v707
    %v712 = vmul.f32 %v711, 1.442695
    %v713 = vpow.pop %v712
    %v714 = vadd.f32 %v710, %v713
    %v715 = vsub.f32 %v705, %v707
    %v716 = vmul.f32 %v715, 1.442695
    %v717 = vpow.pop %v716
    %v718 = vadd.f32 %v714, %v717
    %v719 = vlog2.pop %v718
    %v720 = vmul.f32 %v719, 0.6931472
    %v721 = vadd.f32 %v707, %v720
    %v724 = vrot.slane %v698, 7
    %v725 = vsel %vm489, %v724, %v697
    %v727 = vadd.f32 %v721, %v725
    %v728 = vsel %vm493, %v725, -100000.0
    %p729 = scmp.eq.s32.totalorder %s696, 0
    %s730 = scalar_select %p729, 1, 0
    %v731 = vstv %s730
    %vm732 = vcmp.eq.s32.totalorder %v731, 1
    %v733 = vsel %vm732, %v728, %v727
    %734 = vst [vmem:[#allocation2] sm:$0x3] %v733
    %s735 = sadd.s32 %s24, 7
    %v736 = vld [vmem:[%s1 + $0x7] sm:$0x1]
    %v737 = vld [vmem:[%s1 + $0xf] sm:$0x1]
    %v738 = vld [vmem:[#allocation2] sm:$0x3]
    %739 = vrot.lane.b32.xlu0 %v738, 1
    %v740 = vpop.permute.xlu0 %739
    %v741 = vadd.f32 %v740, %v464
    %742 = vrot.lane.b32.xlu0 %v738, 2
    %v743 = vpop.permute.xlu0 %742
    %v744 = vadd.f32 %v743, %v41
    %v745 = vmax.f32 %v741, %v744
    %v746 = vmax.f32 %v738, %v745
    %v747 = vsub.f32 %v738, %v746
    %v748 = vmul.f32 %v747, 1.442695
    %v749 = vpow.pop %v748
    %v750 = vsub.f32 %v741, %v746
    %v751 = vmul.f32 %v750, 1.442695
    %v752 = vpow.pop %v751
    %v753 = vadd.f32 %v749, %v752
    %v754 = vsub.f32 %v744, %v746
    %v755 = vmul.f32 %v754, 1.442695
    %v756 = vpow.pop %v755
    %v757 = vadd.f32 %v753, %v756
    %v758 = vlog2.pop %v757
    %v759 = vmul.f32 %v758, 0.6931472
    %v760 = vadd.f32 %v746, %v759
    %v763 = vrot.slane %v737, 7
    %v764 = vsel %vm489, %v763, %v736
    %v766 = vadd.f32 %v760, %v764
    %v767 = vsel %vm493, %v764, -100000.0
    %p768 = scmp.eq.s32.totalorder %s735, 0
    %s769 = scalar_select %p768, 1, 0
    %v770 = vstv %s769
    %vm771 = vcmp.eq.s32.totalorder %v770, 1
    %v772 = vsel %vm771, %v767, %v766
    %773 = vst [vmem:[#allocation2] sm:$0x3] %v772
  $region29: #{speech_encoder_ctc_forward.3} parent=0 // pred_fallthru
    _
  // Predicated region
  $region30: #{speech_encoder_ctc_forward.3} parent=0 // pred_check
    _
  $region31: #{speech_encoder_ctc_forward.3} parent=0 // pred_check_branch
    %775 = sbr.rel (0) target = $region33
  $region32: #{speech_encoder_ctc_forward.3} parent=0 // pred_region
    _
  $region33: #{speech_encoder_ctc_forward.3} parent=0 // pred_fallthru
    _
  // Predicated region
  $region34: #{speech_encoder_ctc_forward.3} parent=0 // pred_check
    _
  $region35: #{speech_encoder_ctc_forward.3} parent=0 // pred_check_branch
    %777 = sbr.rel (0) target = $region37
  $region36: #{speech_encoder_ctc_forward.3} parent=0 // pred_region
    _
  $region37: #{speech_encoder_ctc_forward.3} parent=0 // pred_fallthru
    _

</llo_original>
